<compile_context>
chip_gen: v7x
topology: tpu7x:2x2x1
jax: 0.10.0
libtpu: 0.0.40
codegen_flags: <defaults>
</compile_context>

<pallas_src>
import functools

import jax
import jax.numpy as jnp
import numpy as np
from jax.experimental import pallas as pl
from jax.experimental.pallas import tpu as pltpu

HIDDEN = 256


def _deepset_kernel(x_ref, m_ref,
                    w1_ref, b1_ref, w2_ref, b2_ref, w3_ref, b3_ref,
                    w4_ref, b4_ref, w5_ref, b5_ref, w6_ref, b6_ref,
                    out_ref, *, b_tile, n_pad):
    # x_ref: [b_tile*n_pad, D] bf16, m_ref: [b_tile, n_pad] f32,
    # out_ref: [b_tile, dim_out] f32.  Weights bf16, biases f32.
    x = x_ref[...]

    # phi: per-element MLP, batched over all b_tile*n_pad rows.  bf16 MXU
    # matmuls with f32 accumulation; bias/ReLU in f32, re-cast to bf16 for
    # the next matmul.  Masked rows are zeroed by the masked reduce below.
    h = jnp.dot(x, w1_ref[...], preferred_element_type=jnp.float32) + b1_ref[...]
    h = jnp.maximum(h, 0.0).astype(jnp.bfloat16)
    h = jnp.dot(h, w2_ref[...], preferred_element_type=jnp.float32) + b2_ref[...]
    h = jnp.maximum(h, 0.0).astype(jnp.bfloat16)
    h = jnp.dot(h, w3_ref[...], preferred_element_type=jnp.float32) + b3_ref[...]
    # h: [b_tile*n_pad, 256] f32

    # Masked sum over the set dimension on the VPU (f32).
    m = (m_ref[...] != 0.0).astype(jnp.float32)          # [b_tile, n_pad]
    h3 = h.reshape(b_tile, n_pad, HIDDEN)                # layout-preserving split
    s = jnp.sum(h3 * m[:, :, None], axis=1)              # [b_tile, 256] f32

    # rho: MLP on the pooled features, [b_tile,256] bf16 MXU matmuls.
    r = jnp.dot(s.astype(jnp.bfloat16), w4_ref[...],
                preferred_element_type=jnp.float32) + b4_ref[...]
    r = jnp.maximum(r, 0.0).astype(jnp.bfloat16)
    r = jnp.dot(r, w5_ref[...], preferred_element_type=jnp.float32) + b5_ref[...]
    r = jnp.maximum(r, 0.0).astype(jnp.bfloat16)
    r = jnp.dot(r, w6_ref[...], preferred_element_type=jnp.float32) + b6_ref[...]

    # Batches with no valid element must output exactly 0 (rho is *not*
    # applied in the reference for those rows).
    gate = jnp.sum(m, axis=1, keepdims=True) > 0.0       # [b_tile, 1]
    out_ref[...] = jnp.where(gate, r, 0.0).astype(out_ref.dtype)


def deepset_forward(x, mask, params, *, b_tile=None):
    """x: [B, N, dim_in] float32, mask: [B, N] (0/1). Returns [B, dim_out] f32."""
    B, N, D = x.shape
    dim_out = params["w6"].shape[1]

    # Pad N up to a multiple of 8 (sublane) so the in-kernel split between
    # [b_tile*N, 256] and [b_tile, N, 256] is layout-preserving.  Padded set
    # elements carry mask 0 and never contribute.
    n_pad = ((N + 7) // 8) * 8
    if n_pad != N:
        x = jnp.pad(x, ((0, 0), (0, n_pad - N), (0, 0)))
        mask = jnp.pad(mask, ((0, 0), (0, n_pad - N)))

    # Batch tile: target ~2048 phi rows/step (fills the 256-row MXU on
    # v6e/v7x), cap at 256 batches, keep the grid at >=2 steps when B allows
    # (v7x dual TensorCore), and keep it a multiple of 8 (sublane).
    if b_tile is None:
        b_tile = max(8, min(256, 2048 // n_pad))
        half_b = ((pl.cdiv(B, 2) + 7) // 8) * 8
        b_tile = min(b_tile, max(8, half_b))
    b_tile = max(8, ((b_tile + 7) // 8) * 8)

    b_padded = ((B + b_tile - 1) // b_tile) * b_tile
    if b_padded != B:
        x = jnp.pad(x, ((0, b_padded - B), (0, 0), (0, 0)))
        mask = jnp.pad(mask, ((0, b_padded - B), (0, 0)))

    # Flatten x outside the kernel (free XLA reshape) and cast to bf16 for
    # the MXU; lane-dense 2-D f32 mask.
    x_flat = x.reshape(b_padded * n_pad, D).astype(jnp.bfloat16)
    mask2 = mask.astype(jnp.float32)

    # Weights in bf16 (MXU inputs), biases in f32 (added to f32 accumulators).
    weight_names = ("w1", "b1", "w2", "b2", "w3", "b3",
                    "w4", "b4", "w5", "b5", "w6", "b6")
    weight_args = []
    for k in weight_names:
        a = params[k]
        weight_args.append(a.astype(jnp.bfloat16) if k.startswith("w")
                           else a.astype(jnp.float32))

    def full_spec(arr):
        # Constant index map -> block stays resident in VMEM; Pallas does not
        # re-fetch a block whose index is unchanged across steps.
        nd = arr.ndim
        return pl.BlockSpec(arr.shape, lambda b, _nd=nd: (0,) * _nd)

    kernel = functools.partial(_deepset_kernel, b_tile=b_tile, n_pad=n_pad)

    # Advisory cost estimate for XLA's scheduler.
    rows = b_padded * n_pad
    flops = (2 * rows * HIDDEN * (D + 2 * HIDDEN)
             + 2 * b_padded * HIDDEN * (2 * HIDDEN + dim_out))
    bytes_accessed = (x_flat.size * 2 + mask2.size * 4
                      + sum(int(np.prod(a.shape)) * a.dtype.itemsize
                            for a in weight_args)
                      + b_padded * dim_out * 4)

    out = pl.pallas_call(
        kernel,
        out_shape=jax.ShapeDtypeStruct((b_padded, dim_out), jnp.float32),
        grid=(b_padded // b_tile,),
        in_specs=[pl.BlockSpec((b_tile * n_pad, D), lambda b: (b, 0)),
                  pl.BlockSpec((b_tile, n_pad), lambda b: (b, 0))]
                 + [full_spec(a) for a in weight_args],
        out_specs=pl.BlockSpec((b_tile, dim_out), lambda b: (b, 0)),
        compiler_params=pltpu.CompilerParams(
            dimension_semantics=("parallel",),
            vmem_limit_bytes=48 * 1024 * 1024),
        cost_estimate=pl.CostEstimate(flops=flops, transcendentals=0,
                                      bytes_accessed=bytes_accessed),
    )(x_flat, mask2, *weight_args)
    return out[:B]


def init_params(key, dim_in, dim_out):
    """Deterministic synthetic init (PyTorch-Linear-style uniform bounds)."""
    keys = jax.random.split(key, 12)

    def lin(kw, kb, fan_in, fan_out):
        bound = 1.0 / np.sqrt(fan_in)
        w = jax.random.uniform(kw, (fan_in, fan_out), jnp.float32, -bound, bound)
        b = jax.random.uniform(kb, (1, fan_out), jnp.float32, -bound, bound)
        return w, b

    p = {}
    p["w1"], p["b1"] = lin(keys[0], keys[1], dim_in, HIDDEN)
    p["w2"], p["b2"] = lin(keys[2], keys[3], HIDDEN, HIDDEN)
    p["w3"], p["b3"] = lin(keys[4], keys[5], HIDDEN, HIDDEN)
    p["w4"], p["b4"] = lin(keys[6], keys[7], HIDDEN, HIDDEN)
    p["w5"], p["b5"] = lin(keys[8], keys[9], HIDDEN, HIDDEN)
    p["w6"], p["b6"] = lin(keys[10], keys[11], HIDDEN, dim_out)
    return p


def ref_forward(x, mask, params):
    """Pure-JAX reference with the same bf16-matmul / f32-accumulate recipe."""
    B, N, D = x.shape
    bf = jnp.bfloat16

    def dot_bf16(a, w):
        return jnp.dot(a.astype(bf), w.astype(bf),
                       preferred_element_type=jnp.float32)

    h = dot_bf16(x.reshape(B * N, D), params["w1"]) + params["b1"]
    h = dot_bf16(jnp.maximum(h, 0.0), params["w2"]) + params["b2"]
    h = dot_bf16(jnp.maximum(h, 0.0), params["w3"]) + params["b3"]
    h = h.reshape(B, N, HIDDEN)
    m = (mask != 0.0).astype(jnp.float32)
    s = jnp.sum(h * m[:, :, None], axis=1)                     # [B, 256]
    r = dot_bf16(s, params["w4"]) + params["b4"]
    r = dot_bf16(jnp.maximum(r, 0.0), params["w5"]) + params["b5"]
    r = dot_bf16(jnp.maximum(r, 0.0), params["w6"]) + params["b6"]
    valid = (m.sum(axis=1) > 0.0)[:, None]
    return jnp.where(valid, r, 0.0)


if __name__ == "__main__":
    # Small deterministic example.  B=3 / N=6 exercises both the batch-tile
    # padding (3 -> 8) and the set-dimension (sublane) padding (6 -> 8).
    B, N, dim_in, dim_out = 3, 6, 32, 32
    key = jax.random.PRNGKey(0)
    kx, kp = jax.random.split(key, 2)

    x = jax.random.normal(kx, (B, N, dim_in), jnp.float32)
    # batch 0/2: some valid elements; batch 1: no valid elements (exercises
    # the "res stays zero" path of the reference module).
    mask = jnp.array([[1, 1, 1, 0, 1, 0],
                      [0, 0, 0, 0, 0, 0],
                      [1, 0, 1, 1, 0, 1]], dtype=jnp.float32)

    params = init_params(kp, dim_in, dim_out)

    out = deepset_forward(x, mask, params)
    out = jax.block_until_ready(out)

    ref = ref_forward(x, mask, params)
    assert out.shape == (B, dim_out)
    # bf16 matmuls in both kernel and reference -> tolerance scaled to bf16.
    assert np.allclose(np.asarray(out), np.asarray(ref), atol=2e-2, rtol=2e-2), (
        np.abs(np.asarray(out) - np.asarray(ref)).max())
    print("KERNEL_OK")
</pallas_src>

<mosaic_0001>
module attributes {stable_mosaic.version = 11 : i64} {
  func.func @_deepset_kernel(%arg0: i32, %arg1: memref<64x32xbf16, #tpu.memory_space<vmem>>, %arg2: memref<8x8xf32, #tpu.memory_space<vmem>>, %arg3: memref<32x256xbf16, #tpu.memory_space<vmem>>, %arg4: memref<1x256xf32, #tpu.memory_space<vmem>>, %arg5: memref<256x256xbf16, #tpu.memory_space<vmem>>, %arg6: memref<1x256xf32, #tpu.memory_space<vmem>>, %arg7: memref<256x256xbf16, #tpu.memory_space<vmem>>, %arg8: memref<1x256xf32, #tpu.memory_space<vmem>>, %arg9: memref<256x256xbf16, #tpu.memory_space<vmem>>, %arg10: memref<1x256xf32, #tpu.memory_space<vmem>>, %arg11: memref<256x256xbf16, #tpu.memory_space<vmem>>, %arg12: memref<1x256xf32, #tpu.memory_space<vmem>>, %arg13: memref<256x32xbf16, #tpu.memory_space<vmem>>, %arg14: memref<1x32xf32, #tpu.memory_space<vmem>>, %arg15: memref<8x32xf32, #tpu.memory_space<vmem>>) attributes {dimension_semantics = [#tpu.dimension_semantics<parallel>], iteration_bounds = array<i64: 1>, scalar_prefetch = 0 : i64, scratch_operands = 0 : i64, tpu.core_type = #tpu.core_type<tc>, window_params = [{transform_indices = @transform_0, window_bounds = array<i64: 64, 32>}, {transform_indices = @transform_1, window_bounds = array<i64: 8, 8>}, {pipeline_mode = #tpu.pipeline_mode<synchronous>, transform_indices = @transform_2, window_bounds = array<i64: 32, 256>}, {pipeline_mode = #tpu.pipeline_mode<synchronous>, transform_indices = @transform_3, window_bounds = array<i64: 1, 256>}, {pipeline_mode = #tpu.pipeline_mode<synchronous>, transform_indices = @transform_4, window_bounds = array<i64: 256, 256>}, {pipeline_mode = #tpu.pipeline_mode<synchronous>, transform_indices = @transform_5, window_bounds = array<i64: 1, 256>}, {pipeline_mode = #tpu.pipeline_mode<synchronous>, transform_indices = @transform_6, window_bounds = array<i64: 256, 256>}, {pipeline_mode = #tpu.pipeline_mode<synchronous>, transform_indices = @transform_7, window_bounds = array<i64: 1, 256>}, {pipeline_mode = #tpu.pipeline_mode<synchronous>, transform_indices = @transform_8, window_bounds = array<i64: 256, 256>}, {pipeline_mode = #tpu.pipeline_mode<synchronous>, transform_indices = @transform_9, window_bounds = array<i64: 1, 256>}, {pipeline_mode = #tpu.pipeline_mode<synchronous>, transform_indices = @transform_10, window_bounds = array<i64: 256, 256>}, {pipeline_mode = #tpu.pipeline_mode<synchronous>, transform_indices = @transform_11, window_bounds = array<i64: 1, 256>}, {pipeline_mode = #tpu.pipeline_mode<synchronous>, transform_indices = @transform_12, window_bounds = array<i64: 256, 32>}, {pipeline_mode = #tpu.pipeline_mode<synchronous>, transform_indices = @transform_13, window_bounds = array<i64: 1, 32>}, {transform_indices = @transform_14, window_bounds = array<i64: 8, 32>}]} {
    %c0 = arith.constant 0 : index
    %c0_0 = arith.constant 0 : index
    %0 = vector.load %arg1[%c0, %c0_0] : memref<64x32xbf16, #tpu.memory_space<vmem>>, vector<64x32xbf16>
    %c0_1 = arith.constant 0 : index
    %c0_2 = arith.constant 0 : index
    %1 = vector.load %arg3[%c0_1, %c0_2] : memref<32x256xbf16, #tpu.memory_space<vmem>>, vector<32x256xbf16>
    %cst = arith.constant dense<0.000000e+00> : vector<64x256xf32>
    %2 = tpu.matmul %0, %1, %cst {dimension_numbers = #tpu.dot_dimension_numbers<[1], [0], [0], [1], [0, 0, 1, 1], [], []>} : vector<64x32xbf16>, vector<32x256xbf16>, vector<64x256xf32> -> vector<64x256xf32>
    %c0_3 = arith.constant 0 : index
    %c0_4 = arith.constant 0 : index
    %3 = vector.load %arg4[%c0_3, %c0_4] : memref<1x256xf32, #tpu.memory_space<vmem>>, vector<1x256xf32>
    %4 = vector.broadcast %3 : vector<1x256xf32> to vector<64x256xf32>
    %5 = arith.addf %2, %4 : vector<64x256xf32>
    %cst_5 = arith.constant 0.000000e+00 : f32
    %6 = vector.broadcast %cst_5 : f32 to vector<64x256xf32>
    %7 = arith.maximumf %5, %6 : vector<64x256xf32>
    %8 = arith.truncf %7 : vector<64x256xf32> to vector<64x256xbf16>
    %c0_6 = arith.constant 0 : index
    %c0_7 = arith.constant 0 : index
    %9 = vector.load %arg5[%c0_6, %c0_7] : memref<256x256xbf16, #tpu.memory_space<vmem>>, vector<256x256xbf16>
    %cst_8 = arith.constant dense<0.000000e+00> : vector<64x256xf32>
    %10 = tpu.matmul %8, %9, %cst_8 {dimension_numbers = #tpu.dot_dimension_numbers<[1], [0], [0], [1], [0, 0, 1, 1], [], []>} : vector<64x256xbf16>, vector<256x256xbf16>, vector<64x256xf32> -> vector<64x256xf32>
    %c0_9 = arith.constant 0 : index
    %c0_10 = arith.constant 0 : index
    %11 = vector.load %arg6[%c0_9, %c0_10] : memref<1x256xf32, #tpu.memory_space<vmem>>, vector<1x256xf32>
    %12 = vector.broadcast %11 : vector<1x256xf32> to vector<64x256xf32>
    %13 = arith.addf %10, %12 : vector<64x256xf32>
    %cst_11 = arith.constant 0.000000e+00 : f32
    %14 = vector.broadcast %cst_11 : f32 to vector<64x256xf32>
    %15 = arith.maximumf %13, %14 : vector<64x256xf32>
    %16 = arith.truncf %15 : vector<64x256xf32> to vector<64x256xbf16>
    %c0_12 = arith.constant 0 : index
    %c0_13 = arith.constant 0 : index
    %17 = vector.load %arg7[%c0_12, %c0_13] : memref<256x256xbf16, #tpu.memory_space<vmem>>, vector<256x256xbf16>
    %cst_14 = arith.constant dense<0.000000e+00> : vector<64x256xf32>
    %18 = tpu.matmul %16, %17, %cst_14 {dimension_numbers = #tpu.dot_dimension_numbers<[1], [0], [0], [1], [0, 0, 1, 1], [], []>} : vector<64x256xbf16>, vector<256x256xbf16>, vector<64x256xf32> -> vector<64x256xf32>
    %c0_15 = arith.constant 0 : index
    %c0_16 = arith.constant 0 : index
    %19 = vector.load %arg8[%c0_15, %c0_16] : memref<1x256xf32, #tpu.memory_space<vmem>>, vector<1x256xf32>
    %20 = vector.broadcast %19 : vector<1x256xf32> to vector<64x256xf32>
    %21 = arith.addf %18, %20 : vector<64x256xf32>
    %c0_17 = arith.constant 0 : index
    %c0_18 = arith.constant 0 : index
    %22 = vector.load %arg2[%c0_17, %c0_18] : memref<8x8xf32, #tpu.memory_space<vmem>>, vector<8x8xf32>
    %cst_19 = arith.constant 0.000000e+00 : f32
    %23 = vector.broadcast %cst_19 : f32 to vector<8x8xf32>
    %24 = arith.cmpf one, %22, %23 : vector<8x8xf32>
    %25 = arith.extui %24 : vector<8x8xi1> to vector<8x8xi32>
    %26 = arith.sitofp %25 : vector<8x8xi32> to vector<8x8xf32>
    %27 = vector.shape_cast %21 : vector<64x256xf32> to vector<8x8x256xf32>
    %28 = vector.shape_cast %26 : vector<8x8xf32> to vector<8x8x1xf32>
    %29 = vector.broadcast %28 : vector<8x8x1xf32> to vector<8x8x256xf32>
    %30 = arith.mulf %27, %29 : vector<8x8x256xf32>
    %cst_20 = arith.constant dense<0.000000e+00> : vector<8x256xf32>
    %31 = vector.multi_reduction <add>, %30, %cst_20 [1] : vector<8x8x256xf32> to vector<8x256xf32>
    %32 = arith.truncf %31 : vector<8x256xf32> to vector<8x256xbf16>
    %c0_21 = arith.constant 0 : index
    %c0_22 = arith.constant 0 : index
    %33 = vector.load %arg9[%c0_21, %c0_22] : memref<256x256xbf16, #tpu.memory_space<vmem>>, vector<256x256xbf16>
    %cst_23 = arith.constant dense<0.000000e+00> : vector<8x256xf32>
    %34 = tpu.matmul %32, %33, %cst_23 {dimension_numbers = #tpu.dot_dimension_numbers<[1], [0], [0], [1], [0, 0, 1, 1], [], []>} : vector<8x256xbf16>, vector<256x256xbf16>, vector<8x256xf32> -> vector<8x256xf32>
    %c0_24 = arith.constant 0 : index
    %c0_25 = arith.constant 0 : index
    %35 = vector.load %arg10[%c0_24, %c0_25] : memref<1x256xf32, #tpu.memory_space<vmem>>, vector<1x256xf32>
    %36 = vector.broadcast %35 : vector<1x256xf32> to vector<8x256xf32>
    %37 = arith.addf %34, %36 : vector<8x256xf32>
    %cst_26 = arith.constant 0.000000e+00 : f32
    %38 = vector.broadcast %cst_26 : f32 to vector<8x256xf32>
    %39 = arith.maximumf %37, %38 : vector<8x256xf32>
    %40 = arith.truncf %39 : vector<8x256xf32> to vector<8x256xbf16>
    %c0_27 = arith.constant 0 : index
    %c0_28 = arith.constant 0 : index
    %41 = vector.load %arg11[%c0_27, %c0_28] : memref<256x256xbf16, #tpu.memory_space<vmem>>, vector<256x256xbf16>
    %cst_29 = arith.constant dense<0.000000e+00> : vector<8x256xf32>
    %42 = tpu.matmul %40, %41, %cst_29 {dimension_numbers = #tpu.dot_dimension_numbers<[1], [0], [0], [1], [0, 0, 1, 1], [], []>} : vector<8x256xbf16>, vector<256x256xbf16>, vector<8x256xf32> -> vector<8x256xf32>
    %c0_30 = arith.constant 0 : index
    %c0_31 = arith.constant 0 : index
    %43 = vector.load %arg12[%c0_30, %c0_31] : memref<1x256xf32, #tpu.memory_space<vmem>>, vector<1x256xf32>
    %44 = vector.broadcast %43 : vector<1x256xf32> to vector<8x256xf32>
    %45 = arith.addf %42, %44 : vector<8x256xf32>
    %cst_32 = arith.constant 0.000000e+00 : f32
    %46 = vector.broadcast %cst_32 : f32 to vector<8x256xf32>
    %47 = arith.maximumf %45, %46 : vector<8x256xf32>
    %48 = arith.truncf %47 : vector<8x256xf32> to vector<8x256xbf16>
    %c0_33 = arith.constant 0 : index
    %c0_34 = arith.constant 0 : index
    %49 = vector.load %arg13[%c0_33, %c0_34] : memref<256x32xbf16, #tpu.memory_space<vmem>>, vector<256x32xbf16>
    %cst_35 = arith.constant dense<0.000000e+00> : vector<8x32xf32>
    %50 = tpu.matmul %48, %49, %cst_35 {dimension_numbers = #tpu.dot_dimension_numbers<[1], [0], [0], [1], [0, 0, 1, 1], [], []>} : vector<8x256xbf16>, vector<256x32xbf16>, vector<8x32xf32> -> vector<8x32xf32>
    %c0_36 = arith.constant 0 : index
    %c0_37 = arith.constant 0 : index
    %51 = vector.load %arg14[%c0_36, %c0_37] : memref<1x32xf32, #tpu.memory_space<vmem>>, vector<1x32xf32>
    %52 = vector.broadcast %51 : vector<1x32xf32> to vector<8x32xf32>
    %53 = arith.addf %50, %52 : vector<8x32xf32>
    %cst_38 = arith.constant dense<0.000000e+00> : vector<8xf32>
    %54 = vector.multi_reduction <add>, %26, %cst_38 [1] : vector<8x8xf32> to vector<8xf32>
    %55 = vector.shape_cast %54 : vector<8xf32> to vector<8x1xf32>
    %cst_39 = arith.constant 0.000000e+00 : f32
    %56 = vector.broadcast %cst_39 : f32 to vector<8x1xf32>
    %57 = arith.cmpf ogt, %55, %56 : vector<8x1xf32>
    %cst_40 = arith.constant 0.000000e+00 : f32
    %58 = vector.shape_cast %57 : vector<8x1xi1> to vector<8x1xi1>
    %59 = vector.broadcast %58 : vector<8x1xi1> to vector<8x32xi1>
    %60 = vector.broadcast %cst_40 : f32 to vector<8x32xf32>
    %61 = arith.select %59, %53, %60 : vector<8x32xi1>, vector<8x32xf32>
    %c0_41 = arith.constant 0 : index
    %c0_42 = arith.constant 0 : index
    %62 = vector.load %arg15[%c0_41, %c0_42] : memref<8x32xf32, #tpu.memory_space<vmem>>, vector<8x32xf32>
    tpu.vector_store %arg15[%c0_41, %c0_42], %61 {strides = array<i32>} : memref<8x32xf32, #tpu.memory_space<vmem>>, vector<8x32xf32>,
    return
  }
  func.func @transform_0(%arg0: i32) -> (i32, i32) {
    %c0_i32 = arith.constant 0 : i32
    %c0_i32_0 = arith.constant 0 : i32
    return %arg0, %c0_i32 : i32, i32
  }
  func.func @transform_1(%arg0: i32) -> (i32, i32) {
    %c0_i32 = arith.constant 0 : i32
    %c0_i32_0 = arith.constant 0 : i32
    return %arg0, %c0_i32 : i32, i32
  }
  func.func @transform_2(%arg0: i32) -> (i32, i32) {
    %c0_i32 = arith.constant 0 : i32
    %c0_i32_0 = arith.constant 0 : i32
    %c0_i32_1 = arith.constant 0 : i32
    return %c0_i32, %c0_i32_0 : i32, i32
  }
  func.func @transform_3(%arg0: i32) -> (i32, i32) {
    %c0_i32 = arith.constant 0 : i32
    %c0_i32_0 = arith.constant 0 : i32
    %c0_i32_1 = arith.constant 0 : i32
    return %c0_i32, %c0_i32_0 : i32, i32
  }
  func.func @transform_4(%arg0: i32) -> (i32, i32) {
    %c0_i32 = arith.constant 0 : i32
    %c0_i32_0 = arith.constant 0 : i32
    %c0_i32_1 = arith.constant 0 : i32
    return %c0_i32, %c0_i32_0 : i32, i32
  }
  func.func @transform_5(%arg0: i32) -> (i32, i32) {
    %c0_i32 = arith.constant 0 : i32
    %c0_i32_0 = arith.constant 0 : i32
    %c0_i32_1 = arith.constant 0 : i32
    return %c0_i32, %c0_i32_0 : i32, i32
  }
  func.func @transform_6(%arg0: i32) -> (i32, i32) {
    %c0_i32 = arith.constant 0 : i32
    %c0_i32_0 = arith.constant 0 : i32
    %c0_i32_1 = arith.constant 0 : i32
    return %c0_i32, %c0_i32_0 : i32, i32
  }
  func.func @transform_7(%arg0: i32) -> (i32, i32) {
    %c0_i32 = arith.constant 0 : i32
    %c0_i32_0 = arith.constant 0 : i32
    %c0_i32_1 = arith.constant 0 : i32
    return %c0_i32, %c0_i32_0 : i32, i32
  }
  func.func @transform_8(%arg0: i32) -> (i32, i32) {
    %c0_i32 = arith.constant 0 : i32
    %c0_i32_0 = arith.constant 0 : i32
    %c0_i32_1 = arith.constant 0 : i32
    return %c0_i32, %c0_i32_0 : i32, i32
  }
  func.func @transform_9(%arg0: i32) -> (i32, i32) {
    %c0_i32 = arith.constant 0 : i32
    %c0_i32_0 = arith.constant 0 : i32
    %c0_i32_1 = arith.constant 0 : i32
    return %c0_i32, %c0_i32_0 : i32, i32
  }
  func.func @transform_10(%arg0: i32) -> (i32, i32) {
    %c0_i32 = arith.constant 0 : i32
    %c0_i32_0 = arith.constant 0 : i32
    %c0_i32_1 = arith.constant 0 : i32
    return %c0_i32, %c0_i32_0 : i32, i32
  }
  func.func @transform_11(%arg0: i32) -> (i32, i32) {
    %c0_i32 = arith.constant 0 : i32
    %c0_i32_0 = arith.constant 0 : i32
    %c0_i32_1 = arith.constant 0 : i32
    return %c0_i32, %c0_i32_0 : i32, i32
  }
  func.func @transform_12(%arg0: i32) -> (i32, i32) {
    %c0_i32 = arith.constant 0 : i32
    %c0_i32_0 = arith.constant 0 : i32
    %c0_i32_1 = arith.constant 0 : i32
    return %c0_i32, %c0_i32_0 : i32, i32
  }
  func.func @transform_13(%arg0: i32) -> (i32, i32) {
    %c0_i32 = arith.constant 0 : i32
    %c0_i32_0 = arith.constant 0 : i32
    %c0_i32_1 = arith.constant 0 : i32
    return %c0_i32, %c0_i32_0 : i32, i32
  }
  func.func @transform_14(%arg0: i32) -> (i32, i32) {
    %c0_i32 = arith.constant 0 : i32
    %c0_i32_0 = arith.constant 0 : i32
    return %arg0, %c0_i32 : i32, i32
  }
}

</mosaic_0001>

<llo_original>
// kernel: tpu_custom_call.1
$region0: #{tpu_custom_call.1}
  #allocation0 [shape = 'u32[]', space=smem, size = 0x4, offset = 0x4, fixed_abs, tag = 'smem constant byte address 0x4 - core index']
  #allocation1 [shape = 'u32[144,128]{1,0:T(1,128)}', space=vmem, size = 0x12000, scoped, tag = 'internal scratch']
  %s0 = inlined_call_operand.vmem [shape: bf16[64,32], index: 0, kind: input, shape index: {}]
  %s1 = inlined_call_operand.vmem [shape: f32[8,8], index: 1, kind: input, shape index: {}]
  %s2 = inlined_call_operand.vmem [shape: bf16[32,256], index: 2, kind: input, shape index: {}]
  %s3 = inlined_call_operand.vmem [shape: f32[1,256], index: 3, kind: input, shape index: {}]
  %s4 = inlined_call_operand.hbm [shape: bf16[256,256], index: 4, kind: input, shape index: {}]
  %s5 = inlined_call_operand.vmem [shape: f32[1,256], index: 5, kind: input, shape index: {}]
  %s6 = inlined_call_operand.hbm [shape: bf16[256,256], index: 6, kind: input, shape index: {}]
  %s7 = inlined_call_operand.vmem [shape: f32[1,256], index: 7, kind: input, shape index: {}]
  %s8 = inlined_call_operand.hbm [shape: bf16[256,256], index: 8, kind: input, shape index: {}]
  %s9 = inlined_call_operand.vmem [shape: f32[1,256], index: 9, kind: input, shape index: {}]
  %s10 = inlined_call_operand.hbm [shape: bf16[256,256], index: 10, kind: input, shape index: {}]
  %s11 = inlined_call_operand.vmem [shape: f32[1,256], index: 11, kind: input, shape index: {}]
  %s12 = inlined_call_operand.vmem [shape: bf16[256,32], index: 12, kind: input, shape index: {}]
  %s13 = inlined_call_operand.vmem [shape: f32[1,32], index: 13, kind: input, shape index: {}]
  %s14 = inlined_call_operand.hbm [shape: f32[8,32], index: 14, kind: output, shape index: {}]
  %s15 = sld [smem:[#allocation0]]
  $region82: #{tpu_custom_call.1} parent=0
    _
  %s17 = ssub.s32 1, %s15
  %s18 = scalar_select 0, %s17, %s15
  $region1: #{tpu_custom_call.1} parent=0
    #allocation2 [shape = 'u8[131072]{0}', space=vmem, size = 0x20000, scoped, tag = 'input window, operand 4, single buffered']
    #allocation3 [shape = 's32[1]{0}', space=sflag, size = 0x4, scoped, tag = 'scoped memory for tpu_custom_call.1']
    #allocation4 [shape = 's32[1]{0}', space=sflag, size = 0x4, scoped, tag = 'scoped memory for tpu_custom_call.1']
    #allocation5 [shape = 'u8[131072]{0}', space=vmem, size = 0x20000, scoped, tag = 'input window, operand 6, single buffered']
    #allocation6 [shape = 's32[1]{0}', space=sflag, size = 0x4, scoped, tag = 'scoped memory for tpu_custom_call.1']
    #allocation7 [shape = 'u8[131072]{0}', space=vmem, size = 0x20000, scoped, tag = 'input window, operand 8, single buffered']
    #allocation8 [shape = 'u8[131072]{0}', space=vmem, size = 0x20000, scoped, tag = 'input window, operand 10, single buffered']
    #allocation9 [shape = 's32[1]{0}', space=sflag, size = 0x4, scoped, tag = 'scoped memory for tpu_custom_call.1']
    #allocation10 [shape = 'u8[4096]{0}', space=vmem, size = 0x1000, scoped, tag = 'output window, operand 0, single buffered']
    %19 = vsyncpa [#allocation3], 0
    %20 = vsyncpa [#allocation6], 0
    %21 = vsyncpa [#allocation9], 0
    %22 = vsyncpa [#allocation4], 0
    // Predicated region
    $region2: #{tpu_custom_call.1} parent=1 // pred_check
      _
    $region3: #{tpu_custom_call.1} parent=1 // pred_check_branch
      %24 = sbr.rel (0) target = $region5
    $region4: #{tpu_custom_call.1} parent=1 // pred_region
      _
    $region5: #{tpu_custom_call.1} parent=1 // pred_fallthru
      _
    // Predicated region
    $region6: #{tpu_custom_call.1} parent=1 // pred_check
      _
    $region7: #{tpu_custom_call.1} parent=1 // pred_check_branch
      %26 = sbr.rel (0) target = $region9
    $region8: #{tpu_custom_call.1} parent=1 // pred_region
      _
    $region9: #{tpu_custom_call.1} parent=1 // pred_fallthru
      _
    // Predicated region
    $region10: #{tpu_custom_call.1} parent=1 // pred_check
      _
    $region11: #{tpu_custom_call.1} parent=1 // pred_check_branch
      %28 = sbr.rel (0) target = $region13
    $region12: #{tpu_custom_call.1} parent=1 // pred_region
      _
    $region13: #{tpu_custom_call.1} parent=1 // pred_fallthru
      _
    // Predicated region
    $region14: #{tpu_custom_call.1} parent=1 // pred_check
      _
    $region15: #{tpu_custom_call.1} parent=1 // pred_check_branch
      %30 = sbr.rel (0) target = $region17
    $region16: #{tpu_custom_call.1} parent=1 // pred_region
      _
    $region17: #{tpu_custom_call.1} parent=1 // pred_fallthru
      _
    // Predicated region
    $region18: #{tpu_custom_call.1} parent=1 // pred_check
      _
    $region19: #{tpu_custom_call.1} parent=1 // pred_check_branch
      %32 = sbr.rel (0) target = $region21
    $region20: #{tpu_custom_call.1} parent=1 // pred_region
      %s34 = ssub.s32 4096, 4096
      %35 = vsyncadd [#allocation3], %s34
      %s36 = sshll.u32 [#allocation2], 4
      %s37 = int_to_ptr.vmem [resolvable:$true] %s36
      %42 = dma.hbm_to_vmem [thread:$0]  %s4, 4096, %s37, [#allocation3], 128, 128, 8
    $region21: #{tpu_custom_call.1} parent=1 // pred_fallthru
      _
    // Predicated region
    $region22: #{tpu_custom_call.1} parent=1 // pred_check
      _
    $region23: #{tpu_custom_call.1} parent=1 // pred_check_branch
      %44 = sbr.rel (0) target = $region25
    $region24: #{tpu_custom_call.1} parent=1 // pred_region
      _
    $region25: #{tpu_custom_call.1} parent=1 // pred_fallthru
      _
    // Predicated region
    $region26: #{tpu_custom_call.1} parent=1 // pred_check
      _
    $region27: #{tpu_custom_call.1} parent=1 // pred_check_branch
      %46 = sbr.rel (0) target = $region29
    $region28: #{tpu_custom_call.1} parent=1 // pred_region
      %s48 = ssub.s32 4096, 4096
      %49 = vsyncadd [#allocation6], %s48
      %s50 = sshll.u32 [#allocation5], 4
      %s51 = int_to_ptr.vmem [resolvable:$true] %s50
      %56 = dma.hbm_to_vmem [thread:$0]  %s6, 4096, %s51, [#allocation6], 128, 128, 8
    $region29: #{tpu_custom_call.1} parent=1 // pred_fallthru
      _
    // Predicated region
    $region30: #{tpu_custom_call.1} parent=1 // pred_check
      _
    $region31: #{tpu_custom_call.1} parent=1 // pred_check_branch
      %58 = sbr.rel (0) target = $region33
    $region32: #{tpu_custom_call.1} parent=1 // pred_region
      _
    $region33: #{tpu_custom_call.1} parent=1 // pred_fallthru
      _
    // Predicated region
    $region34: #{tpu_custom_call.1} parent=1 // pred_check
      _
    $region35: #{tpu_custom_call.1} parent=1 // pred_check_branch
      %60 = sbr.rel (0) target = $region37
    $region36: #{tpu_custom_call.1} parent=1 // pred_region
      %s62 = ssub.s32 4096, 4096
      %63 = vsyncadd [#allocation6], %s62
      %s64 = sshll.u32 [#allocation7], 4
      %s65 = int_to_ptr.vmem [resolvable:$true] %s64
      %70 = dma.hbm_to_vmem [thread:$0]  %s8, 4096, %s65, [#allocation6], 128, 128, 8
    $region37: #{tpu_custom_call.1} parent=1 // pred_fallthru
      _
    // Predicated region
    $region38: #{tpu_custom_call.1} parent=1 // pred_check
      _
    $region39: #{tpu_custom_call.1} parent=1 // pred_check_branch
      %72 = sbr.rel (0) target = $region41
    $region40: #{tpu_custom_call.1} parent=1 // pred_region
      _
    $region41: #{tpu_custom_call.1} parent=1 // pred_fallthru
      _
    // Predicated region
    $region42: #{tpu_custom_call.1} parent=1 // pred_check
      _
    $region43: #{tpu_custom_call.1} parent=1 // pred_check_branch
      %74 = sbr.rel (0) target = $region45
    $region44: #{tpu_custom_call.1} parent=1 // pred_region
      %s76 = ssub.s32 4096, 4096
      %77 = vsyncadd [#allocation9], %s76
      %s78 = sshll.u32 [#allocation8], 4
      %s79 = int_to_ptr.vmem [resolvable:$true] %s78
      %84 = dma.hbm_to_vmem [thread:$0]  %s10, 4096, %s79, [#allocation9], 128, 128, 8
    $region45: #{tpu_custom_call.1} parent=1 // pred_fallthru
      _
    // Predicated region
    $region46: #{tpu_custom_call.1} parent=1 // pred_check
      _
    $region47: #{tpu_custom_call.1} parent=1 // pred_check_branch
      %86 = sbr.rel (0) target = $region49
    $region48: #{tpu_custom_call.1} parent=1 // pred_region
      _
    $region49: #{tpu_custom_call.1} parent=1 // pred_fallthru
      _
    // Predicated region
    $region50: #{tpu_custom_call.1} parent=1 // pred_check
      _
    $region51: #{tpu_custom_call.1} parent=1 // pred_check_branch
      %88 = sbr.rel (0) target = $region53
    $region52: #{tpu_custom_call.1} parent=1 // pred_region
      _
    $region53: #{tpu_custom_call.1} parent=1 // pred_fallthru
      _
    // Predicated region
    $region54: #{tpu_custom_call.1} parent=1 // pred_check
      _
    $region55: #{tpu_custom_call.1} parent=1 // pred_check_branch
      %90 = sbr.rel (0) target = $region57
    $region56: #{tpu_custom_call.1} parent=1 // pred_region
      _
    $region57: #{tpu_custom_call.1} parent=1 // pred_fallthru
      _
    // Predicated region
    $region58: #{tpu_custom_call.1} parent=1 // pred_check
      _
    $region59: #{tpu_custom_call.1} parent=1 // pred_check_branch
      %92 = sbr.rel (0) target = $region61
    $region60: #{tpu_custom_call.1} parent=1 // pred_region
      %93 = dma.done [#allocation3], 4096
    $region61: #{tpu_custom_call.1} parent=1 // pred_fallthru
      _
    // Predicated region
    $region62: #{tpu_custom_call.1} parent=1 // pred_check
      _
    $region63: #{tpu_custom_call.1} parent=1 // pred_check_branch
      %95 = sbr.rel (0) target = $region65
    $region64: #{tpu_custom_call.1} parent=1 // pred_region
      %96 = dma.done [#allocation6], 4096
    $region65: #{tpu_custom_call.1} parent=1 // pred_fallthru
      _
    // Predicated region
    $region66: #{tpu_custom_call.1} parent=1 // pred_check
      _
    $region67: #{tpu_custom_call.1} parent=1 // pred_check_branch
      %98 = sbr.rel (0) target = $region69
    $region68: #{tpu_custom_call.1} parent=1 // pred_region
      %99 = dma.done [#allocation6], 4096
    $region69: #{tpu_custom_call.1} parent=1 // pred_fallthru
      _
    // Predicated region
    $region70: #{tpu_custom_call.1} parent=1 // pred_check
      _
    $region71: #{tpu_custom_call.1} parent=1 // pred_check_branch
      %101 = sbr.rel (0) target = $region73
    $region72: #{tpu_custom_call.1} parent=1 // pred_region
      %102 = dma.done [#allocation9], 4096
    $region73: #{tpu_custom_call.1} parent=1 // pred_fallthru
      _
    %v104 = vld [vmem:[%s0] sm:$0xf]
    %v105 = vld [vmem:[%s0 + $0x4] sm:$0xf]
    %v106 = vld [vmem:[%s0 + $0x8] sm:$0xf]
    %v107 = vld [vmem:[%s0 + $0xc] sm:$0xf]
    %v108 = vld [vmem:[%s0 + $0x10] sm:$0xf]
    %v109 = vld [vmem:[%s0 + $0x14] sm:$0xf]
    %v110 = vld [vmem:[%s0 + $0x18] sm:$0xf]
    %v111 = vld [vmem:[%s0 + $0x1c] sm:$0xf]
    %v112 = vld [vmem:[%s2] sm:$0xff]
    %v113 = vld [vmem:[%s2 + $0x8] sm:$0xff]
    %v114 = vld [vmem:[%s2 + $0x10] sm:$0xff]
    %v115 = vld [vmem:[%s2 + $0x18] sm:$0xff]
    %v116 = vld [vmem:[%s3] sm:$0x3]
    %v118 = vlaneseq
    %v119 = vshrl.u32 %v118, 7
    %v120 = vsub.s32 0, %v119
    %v121 = vrot.slane %v116, %v120
    %v122 = vlaneseq
    %v123 = vshrl.u32 %v122, 7
    %v124 = vsub.s32 1, %v123
    %v125 = vrot.slane %v116, %v124
    %v136 = vunpack.c.l.b16 %v104
    %v137 = vunpack.c.l.b16 %v105
    %v138 = vunpack.c.l.b16 %v106
    %v139 = vunpack.c.l.b16 %v107
    %v140 = vunpack.c.l.b16 %v108
    %v141 = vunpack.c.l.b16 %v109
    %v142 = vunpack.c.l.b16 %v110
    %v143 = vunpack.c.l.b16 %v111
    %v144 = vpack.c.b16 %v137, %v136
    %v145 = vpack.c.b16 %v139, %v138
    %v146 = vpack.c.b16 %v141, %v140
    %v147 = vpack.c.b16 %v143, %v142
    %v152 = vunpack.c.l.b16 %v112
    %v153 = vunpack.c.h.b16 %v112
    %v154 = vunpack.c.l.b16 %v113
    %v155 = vunpack.c.h.b16 %v113
    %v156 = vunpack.c.l.b16 %v114
    %v157 = vunpack.c.h.b16 %v114
    %v158 = vunpack.c.l.b16 %v115
    %v159 = vunpack.c.h.b16 %v115
    %v160 = vpack.c.b16 %v154, %v152
    %v161 = vpack.c.b16 %v155, %v153
    %v162 = vpack.c.b16 %v158, %v156
    %v163 = vpack.c.b16 %v159, %v157
    %vm168 = vcmask 261120
    %v170 = vsel %vm168, %v144, 0
    %v173 = vsel %vm168, %v145, 0
    %v176 = vsel %vm168, %v146, 0
    %v179 = vsel %vm168, %v147, 0
    %181 = vmatprep.subr.bf16.mxu0 %v161
    %182 = vmatpush1.bf16.msra.mxu0 %v160
    %183 = vmatprep.subr.bf16.mxu0 %v163
    %184 = vmatpush1.bf16.msra.mxu0 %v162
    %185 = vmatprep.subr.bf16.mxu0 0
    %186 = vmatpush1.bf16.msra.mxu0 0
    %187 = vmatprep.subr.bf16.mxu0 0
    %188 = vmatpush1.bf16.msra.mxu0 0
    %189 = vmatprep.subr.bf16.mxu0 0
    %190 = vmatpush1.bf16.msra.mxu0 0
    %191 = vmatprep.subr.bf16.mxu0 0
    %192 = vmatpush1.bf16.msra.mxu0 0
    %193 = vmatprep.subr.bf16.mxu0 0
    %194 = vmatpush1.bf16.msra.mxu0 0
    %195 = vmatprep.subr.bf16.mxu0 0
    %196 = vmatpush1.bf16.msra.mxu0 0
    %197 = vmatprep.subr.bf16.mxu0 0
    %198 = vmatpush1.bf16.msra.mxu0 0
    %199 = vmatprep.subr.bf16.mxu0 0
    %200 = vmatpush1.bf16.msra.mxu0 0
    %201 = vmatprep.subr.bf16.mxu0 0
    %202 = vmatpush1.bf16.msra.mxu0 0
    %203 = vmatprep.subr.bf16.mxu0 0
    %204 = vmatpush1.bf16.msra.mxu0 0
    %205 = vmatprep.subr.bf16.mxu0 0
    %206 = vmatpush1.bf16.msra.mxu0 0
    %207 = vmatprep.subr.bf16.mxu0 0
    %208 = vmatpush1.bf16.msra.mxu0 0
    %209 = vmatprep.subr.bf16.mxu0 0
    %210 = vmatpush1.bf16.msra.mxu0 0
    %211 = vmatprep.subr.bf16.mxu0 0
    %212 = vmatpush1.bf16.msra.mxu0 0
    %213 = vmatprep.mubr.bf16.mxu0 0
    %214 = vmatmul.mubr.bf16.gmra.mrb[0].mxu0 %v170
    %v215 = vpop.f32.mrb[0].mxu0
    %v216 = vadd.f32 %v121, %v215
    %v217 = vpop.f32.mrb[0].mxu0
    %v218 = vadd.f32 %v125, %v217
    %v219 = vpop.f32.mrb[0].mxu0
    %v220 = vadd.f32 %v121, %v219
    %v221 = vpop.f32.mrb[0].mxu0
    %v222 = vadd.f32 %v125, %v221
    %223 = vmatprep.mubr.bf16.mxu0 0
    %224 = vmatmul.mubr.bf16.gmra.mrb[0].mxu0 %v173
    %v225 = vpop.f32.mrb[0].mxu0
    %v226 = vadd.f32 %v121, %v225
    %v227 = vpop.f32.mrb[0].mxu0
    %v228 = vadd.f32 %v125, %v227
    %v229 = vpop.f32.mrb[0].mxu0
    %v230 = vadd.f32 %v121, %v229
    %v231 = vpop.f32.mrb[0].mxu0
    %v232 = vadd.f32 %v125, %v231
    %233 = vmatprep.mubr.bf16.mxu0 0
    %234 = vmatmul.mubr.bf16.gmra.mrb[0].mxu0 %v176
    %v235 = vpop.f32.mrb[0].mxu0
    %v236 = vadd.f32 %v121, %v235
    %v237 = vpop.f32.mrb[0].mxu0
    %v238 = vadd.f32 %v125, %v237
    %v239 = vpop.f32.mrb[0].mxu0
    %v240 = vadd.f32 %v121, %v239
    %v241 = vpop.f32.mrb[0].mxu0
    %v242 = vadd.f32 %v125, %v241
    %243 = vmatprep.mubr.bf16.mxu0 0
    %244 = vmatmul.mubr.bf16.gmra.mrb[0].mxu0 %v179
    %v245 = vpop.f32.mrb[0].mxu0
    %v246 = vadd.f32 %v121, %v245
    %v247 = vpop.f32.mrb[0].mxu0
    %v248 = vadd.f32 %v125, %v247
    %v249 = vpop.f32.mrb[0].mxu0
    %v250 = vadd.f32 %v121, %v249
    %v251 = vpop.f32.mrb[0].mxu0
    %v252 = vadd.f32 %v125, %v251
    %253 = vdwg.mxu0
    %v254 = vmax.f32 %v216, 0.0
    %v255 = vmax.f32 %v218, 0.0
    %v256 = vmax.f32 %v220, 0.0
    %v257 = vmax.f32 %v222, 0.0
    %v258 = vmax.f32 %v226, 0.0
    %v259 = vmax.f32 %v228, 0.0
    %v260 = vmax.f32 %v230, 0.0
    %v261 = vmax.f32 %v232, 0.0
    %v262 = vmax.f32 %v236, 0.0
    %v263 = vmax.f32 %v238, 0.0
    %v264 = vmax.f32 %v240, 0.0
    %v265 = vmax.f32 %v242, 0.0
    %v266 = vmax.f32 %v246, 0.0
    %v267 = vmax.f32 %v248, 0.0
    %v268 = vmax.f32 %v250, 0.0
    %v269 = vmax.f32 %v252, 0.0
    %v270 = vpack.c.bf16 %v256, %v254
    %v271 = vpack.c.bf16 %v257, %v255
    %v272 = vpack.c.bf16 %v260, %v258
    %v273 = vpack.c.bf16 %v261, %v259
    %v274 = vpack.c.bf16 %v264, %v262
    %v275 = vpack.c.bf16 %v265, %v263
    %v276 = vpack.c.bf16 %v268, %v266
    %v277 = vpack.c.bf16 %v269, %v267
    %v278 = vld [vmem:[#allocation2] sm:$0xff]
    %v279 = vld [vmem:[#allocation2 + $0x8] sm:$0xff]
    %v280 = vld [vmem:[#allocation2 + $0x10] sm:$0xff]
    %v281 = vld [vmem:[#allocation2 + $0x18] sm:$0xff]
    %v282 = vld [vmem:[#allocation2 + $0x20] sm:$0xff]
    %v283 = vld [vmem:[#allocation2 + $0x28] sm:$0xff]
    %v284 = vld [vmem:[#allocation2 + $0x30] sm:$0xff]
    %v285 = vld [vmem:[#allocation2 + $0x38] sm:$0xff]
    %v286 = vld [vmem:[#allocation2 + $0x40] sm:$0xff]
    %v287 = vld [vmem:[#allocation2 + $0x48] sm:$0xff]
    %v288 = vld [vmem:[#allocation2 + $0x50] sm:$0xff]
    %v289 = vld [vmem:[#allocation2 + $0x58] sm:$0xff]
    %v290 = vld [vmem:[#allocation2 + $0x60] sm:$0xff]
    %v291 = vld [vmem:[#allocation2 + $0x68] sm:$0xff]
    %v292 = vld [vmem:[#allocation2 + $0x70] sm:$0xff]
    %v293 = vld [vmem:[#allocation2 + $0x78] sm:$0xff]
    %v294 = vld [vmem:[#allocation2 + $0x80] sm:$0xff]
    %v295 = vld [vmem:[#allocation2 + $0x88] sm:$0xff]
    %v296 = vld [vmem:[#allocation2 + $0x90] sm:$0xff]
    %v297 = vld [vmem:[#allocation2 + $0x98] sm:$0xff]
    %v298 = vld [vmem:[#allocation2 + $0xa0] sm:$0xff]
    %v299 = vld [vmem:[#allocation2 + $0xa8] sm:$0xff]
    %v300 = vld [vmem:[#allocation2 + $0xb0] sm:$0xff]
    %v301 = vld [vmem:[#allocation2 + $0xb8] sm:$0xff]
    %v302 = vld [vmem:[#allocation2 + $0xc0] sm:$0xff]
    %v303 = vld [vmem:[#allocation2 + $0xc8] sm:$0xff]
    %v304 = vld [vmem:[#allocation2 + $0xd0] sm:$0xff]
    %v305 = vld [vmem:[#allocation2 + $0xd8] sm:$0xff]
    %v306 = vld [vmem:[#allocation2 + $0xe0] sm:$0xff]
    %v307 = vld [vmem:[#allocation2 + $0xe8] sm:$0xff]
    %v308 = vld [vmem:[#allocation2 + $0xf0] sm:$0xff]
    %v309 = vld [vmem:[#allocation2 + $0xf8] sm:$0xff]
    %v310 = vld [vmem:[%s5] sm:$0x3]
    %v312 = vlaneseq
    %v313 = vshrl.u32 %v312, 7
    %v314 = vsub.s32 0, %v313
    %v315 = vrot.slane %v310, %v314
    %v316 = vlaneseq
    %v317 = vshrl.u32 %v316, 7
    %v318 = vsub.s32 1, %v317
    %v319 = vrot.slane %v310, %v318
    %v354 = vunpack.c.l.b16 %v278
    %v355 = vunpack.c.h.b16 %v278
    %v356 = vunpack.c.l.b16 %v279
    %v357 = vunpack.c.h.b16 %v279
    %v358 = vunpack.c.l.b16 %v280
    %v359 = vunpack.c.h.b16 %v280
    %v360 = vunpack.c.l.b16 %v281
    %v361 = vunpack.c.h.b16 %v281
    %v362 = vunpack.c.l.b16 %v282
    %v363 = vunpack.c.h.b16 %v282
    %v364 = vunpack.c.l.b16 %v283
    %v365 = vunpack.c.h.b16 %v283
    %v366 = vunpack.c.l.b16 %v284
    %v367 = vunpack.c.h.b16 %v284
    %v368 = vunpack.c.l.b16 %v285
    %v369 = vunpack.c.h.b16 %v285
    %v370 = vunpack.c.l.b16 %v286
    %v371 = vunpack.c.h.b16 %v286
    %v372 = vunpack.c.l.b16 %v287
    %v373 = vunpack.c.h.b16 %v287
    %v374 = vunpack.c.l.b16 %v288
    %v375 = vunpack.c.h.b16 %v288
    %v376 = vunpack.c.l.b16 %v289
    %v377 = vunpack.c.h.b16 %v289
    %v378 = vunpack.c.l.b16 %v290
    %v379 = vunpack.c.h.b16 %v290
    %v380 = vunpack.c.l.b16 %v291
    %v381 = vunpack.c.h.b16 %v291
    %v382 = vunpack.c.l.b16 %v292
    %v383 = vunpack.c.h.b16 %v292
    %v384 = vunpack.c.l.b16 %v293
    %v385 = vunpack.c.h.b16 %v293
    %v386 = vunpack.c.l.b16 %v294
    %v387 = vunpack.c.h.b16 %v294
    %v388 = vunpack.c.l.b16 %v295
    %v389 = vunpack.c.h.b16 %v295
    %v390 = vunpack.c.l.b16 %v296
    %v391 = vunpack.c.h.b16 %v296
    %v392 = vunpack.c.l.b16 %v297
    %v393 = vunpack.c.h.b16 %v297
    %v394 = vunpack.c.l.b16 %v298
    %v395 = vunpack.c.h.b16 %v298
    %v396 = vunpack.c.l.b16 %v299
    %v397 = vunpack.c.h.b16 %v299
    %v398 = vunpack.c.l.b16 %v300
    %v399 = vunpack.c.h.b16 %v300
    %v400 = vunpack.c.l.b16 %v301
    %v401 = vunpack.c.h.b16 %v301
    %v402 = vunpack.c.l.b16 %v302
    %v403 = vunpack.c.h.b16 %v302
    %v404 = vunpack.c.l.b16 %v303
    %v405 = vunpack.c.h.b16 %v303
    %v406 = vunpack.c.l.b16 %v304
    %v407 = vunpack.c.h.b16 %v304
    %v408 = vunpack.c.l.b16 %v305
    %v409 = vunpack.c.h.b16 %v305
    %v410 = vunpack.c.l.b16 %v306
    %v411 = vunpack.c.h.b16 %v306
    %v412 = vunpack.c.l.b16 %v307
    %v413 = vunpack.c.h.b16 %v307
    %v414 = vunpack.c.l.b16 %v308
    %v415 = vunpack.c.h.b16 %v308
    %v416 = vunpack.c.l.b16 %v309
    %v417 = vunpack.c.h.b16 %v309
    %v418 = vpack.c.b16 %v356, %v354
    %v419 = vpack.c.b16 %v357, %v355
    %v420 = vpack.c.b16 %v360, %v358
    %v421 = vpack.c.b16 %v361, %v359
    %v422 = vpack.c.b16 %v364, %v362
    %v423 = vpack.c.b16 %v365, %v363
    %v424 = vpack.c.b16 %v368, %v366
    %v425 = vpack.c.b16 %v369, %v367
    %v426 = vpack.c.b16 %v372, %v370
    %v427 = vpack.c.b16 %v373, %v371
    %v428 = vpack.c.b16 %v376, %v374
    %v429 = vpack.c.b16 %v377, %v375
    %v430 = vpack.c.b16 %v380, %v378
    %v431 = vpack.c.b16 %v381, %v379
    %v432 = vpack.c.b16 %v384, %v382
    %v433 = vpack.c.b16 %v385, %v383
    %v434 = vpack.c.b16 %v388, %v386
    %v435 = vpack.c.b16 %v389, %v387
    %v436 = vpack.c.b16 %v392, %v390
    %v437 = vpack.c.b16 %v393, %v391
    %v438 = vpack.c.b16 %v396, %v394
    %v439 = vpack.c.b16 %v397, %v395
    %v440 = vpack.c.b16 %v400, %v398
    %v441 = vpack.c.b16 %v401, %v399
    %v442 = vpack.c.b16 %v404, %v402
    %v443 = vpack.c.b16 %v405, %v403
    %v444 = vpack.c.b16 %v408, %v406
    %v445 = vpack.c.b16 %v409, %v407
    %v446 = vpack.c.b16 %v412, %v410
    %v447 = vpack.c.b16 %v413, %v411
    %v448 = vpack.c.b16 %v416, %v414
    %v449 = vpack.c.b16 %v417, %v415
    %482 = vmatprep.subr.bf16.mxu0 %v419
    %483 = vmatpush1.bf16.msra.mxu0 %v418
    %484 = vmatprep.subr.bf16.mxu0 %v421
    %485 = vmatpush1.bf16.msra.mxu0 %v420
    %486 = vmatprep.subr.bf16.mxu0 %v423
    %487 = vmatpush1.bf16.msra.mxu0 %v422
    %488 = vmatprep.subr.bf16.mxu0 %v425
    %489 = vmatpush1.bf16.msra.mxu0 %v424
    %490 = vmatprep.subr.bf16.mxu0 %v427
    %491 = vmatpush1.bf16.msra.mxu0 %v426
    %492 = vmatprep.subr.bf16.mxu0 %v429
    %493 = vmatpush1.bf16.msra.mxu0 %v428
    %494 = vmatprep.subr.bf16.mxu0 %v431
    %495 = vmatpush1.bf16.msra.mxu0 %v430
    %496 = vmatprep.subr.bf16.mxu0 %v433
    %497 = vmatpush1.bf16.msra.mxu0 %v432
    %498 = vmatprep.subr.bf16.mxu0 %v435
    %499 = vmatpush1.bf16.msra.mxu0 %v434
    %500 = vmatprep.subr.bf16.mxu0 %v437
    %501 = vmatpush1.bf16.msra.mxu0 %v436
    %502 = vmatprep.subr.bf16.mxu0 %v439
    %503 = vmatpush1.bf16.msra.mxu0 %v438
    %504 = vmatprep.subr.bf16.mxu0 %v441
    %505 = vmatpush1.bf16.msra.mxu0 %v440
    %506 = vmatprep.subr.bf16.mxu0 %v443
    %507 = vmatpush1.bf16.msra.mxu0 %v442
    %508 = vmatprep.subr.bf16.mxu0 %v445
    %509 = vmatpush1.bf16.msra.mxu0 %v444
    %510 = vmatprep.subr.bf16.mxu0 %v447
    %511 = vmatpush1.bf16.msra.mxu0 %v446
    %512 = vmatprep.subr.bf16.mxu0 %v449
    %513 = vmatpush1.bf16.msra.mxu0 %v448
    %514 = vmatprep.mubr.bf16.mxu0 %v271
    %515 = vmatmul.mubr.bf16.gmra.mrb[0].mxu0 %v270
    %v516 = vpop.f32.mrb[0].mxu0
    %v517 = vadd.f32 %v315, %v516
    %v518 = vpop.f32.mrb[0].mxu0
    %v519 = vadd.f32 %v319, %v518
    %v520 = vpop.f32.mrb[0].mxu0
    %v521 = vadd.f32 %v315, %v520
    %v522 = vpop.f32.mrb[0].mxu0
    %v523 = vadd.f32 %v319, %v522
    %524 = vmatprep.mubr.bf16.mxu0 %v273
    %525 = vmatmul.mubr.bf16.gmra.mrb[0].mxu0 %v272
    %v526 = vpop.f32.mrb[0].mxu0
    %v527 = vadd.f32 %v315, %v526
    %v528 = vpop.f32.mrb[0].mxu0
    %v529 = vadd.f32 %v319, %v528
    %v530 = vpop.f32.mrb[0].mxu0
    %v531 = vadd.f32 %v315, %v530
    %v532 = vpop.f32.mrb[0].mxu0
    %v533 = vadd.f32 %v319, %v532
    %534 = vmatprep.mubr.bf16.mxu0 %v275
    %535 = vmatmul.mubr.bf16.gmra.mrb[0].mxu0 %v274
    %v536 = vpop.f32.mrb[0].mxu0
    %v537 = vadd.f32 %v315, %v536
    %v538 = vpop.f32.mrb[0].mxu0
    %v539 = vadd.f32 %v319, %v538
    %v540 = vpop.f32.mrb[0].mxu0
    %v541 = vadd.f32 %v315, %v540
    %v542 = vpop.f32.mrb[0].mxu0
    %v543 = vadd.f32 %v319, %v542
    %544 = vmatprep.mubr.bf16.mxu0 %v277
    %545 = vmatmul.mubr.bf16.gmra.mrb[0].mxu0 %v276
    %v546 = vpop.f32.mrb[0].mxu0
    %v547 = vadd.f32 %v315, %v546
    %v548 = vpop.f32.mrb[0].mxu0
    %v549 = vadd.f32 %v319, %v548
    %v550 = vpop.f32.mrb[0].mxu0
    %v551 = vadd.f32 %v315, %v550
    %v552 = vpop.f32.mrb[0].mxu0
    %v553 = vadd.f32 %v319, %v552
    %554 = vdwg.mxu0
    %v555 = vmax.f32 %v517, 0.0
    %v556 = vmax.f32 %v519, 0.0
    %v557 = vmax.f32 %v521, 0.0
    %v558 = vmax.f32 %v523, 0.0
    %v559 = vmax.f32 %v527, 0.0
    %v560 = vmax.f32 %v529, 0.0
    %v561 = vmax.f32 %v531, 0.0
    %v562 = vmax.f32 %v533, 0.0
    %v563 = vmax.f32 %v537, 0.0
    %v564 = vmax.f32 %v539, 0.0
    %v565 = vmax.f32 %v541, 0.0
    %v566 = vmax.f32 %v543, 0.0
    %v567 = vmax.f32 %v547, 0.0
    %v568 = vmax.f32 %v549, 0.0
    %v569 = vmax.f32 %v551, 0.0
    %v570 = vmax.f32 %v553, 0.0
    %v571 = vpack.c.bf16 %v557, %v555
    %v572 = vpack.c.bf16 %v558, %v556
    %v573 = vpack.c.bf16 %v561, %v559
    %v574 = vpack.c.bf16 %v562, %v560
    %v575 = vpack.c.bf16 %v565, %v563
    %v576 = vpack.c.bf16 %v566, %v564
    %v577 = vpack.c.bf16 %v569, %v567
    %v578 = vpack.c.bf16 %v570, %v568
    %v579 = vld [vmem:[#allocation5] sm:$0xff]
    %v580 = vld [vmem:[#allocation5 + $0x8] sm:$0xff]
    %v581 = vld [vmem:[#allocation5 + $0x10] sm:$0xff]
    %v582 = vld [vmem:[#allocation5 + $0x18] sm:$0xff]
    %v583 = vld [vmem:[#allocation5 + $0x20] sm:$0xff]
    %v584 = vld [vmem:[#allocation5 + $0x28] sm:$0xff]
    %v585 = vld [vmem:[#allocation5 + $0x30] sm:$0xff]
    %v586 = vld [vmem:[#allocation5 + $0x38] sm:$0xff]
    %v587 = vld [vmem:[#allocation5 + $0x40] sm:$0xff]
    %v588 = vld [vmem:[#allocation5 + $0x48] sm:$0xff]
    %v589 = vld [vmem:[#allocation5 + $0x50] sm:$0xff]
    %v590 = vld [vmem:[#allocation5 + $0x58] sm:$0xff]
    %v591 = vld [vmem:[#allocation5 + $0x60] sm:$0xff]
    %v592 = vld [vmem:[#allocation5 + $0x68] sm:$0xff]
    %v593 = vld [vmem:[#allocation5 + $0x70] sm:$0xff]
    %v594 = vld [vmem:[#allocation5 + $0x78] sm:$0xff]
    %v595 = vld [vmem:[#allocation5 + $0x80] sm:$0xff]
    %v596 = vld [vmem:[#allocation5 + $0x88] sm:$0xff]
    %v597 = vld [vmem:[#allocation5 + $0x90] sm:$0xff]
    %v598 = vld [vmem:[#allocation5 + $0x98] sm:$0xff]
    %v599 = vld [vmem:[#allocation5 + $0xa0] sm:$0xff]
    %v600 = vld [vmem:[#allocation5 + $0xa8] sm:$0xff]
    %v601 = vld [vmem:[#allocation5 + $0xb0] sm:$0xff]
    %v602 = vld [vmem:[#allocation5 + $0xb8] sm:$0xff]
    %v603 = vld [vmem:[#allocation5 + $0xc0] sm:$0xff]
    %v604 = vld [vmem:[#allocation5 + $0xc8] sm:$0xff]
    %v605 = vld [vmem:[#allocation5 + $0xd0] sm:$0xff]
    %v606 = vld [vmem:[#allocation5 + $0xd8] sm:$0xff]
    %v607 = vld [vmem:[#allocation5 + $0xe0] sm:$0xff]
    %v608 = vld [vmem:[#allocation5 + $0xe8] sm:$0xff]
    %v609 = vld [vmem:[#allocation5 + $0xf0] sm:$0xff]
    %v610 = vld [vmem:[#allocation5 + $0xf8] sm:$0xff]
    %v611 = vld [vmem:[%s7] sm:$0x3]
    %v613 = vlaneseq
    %v614 = vshrl.u32 %v613, 7
    %v615 = vsub.s32 0, %v614
    %v616 = vrot.slane %v611, %v615
    %v617 = vlaneseq
    %v618 = vshrl.u32 %v617, 7
    %v619 = vsub.s32 1, %v618
    %v620 = vrot.slane %v611, %v619
    %v655 = vunpack.c.l.b16 %v579
    %v656 = vunpack.c.h.b16 %v579
    %v657 = vunpack.c.l.b16 %v580
    %v658 = vunpack.c.h.b16 %v580
    %v659 = vunpack.c.l.b16 %v581
    %v660 = vunpack.c.h.b16 %v581
    %v661 = vunpack.c.l.b16 %v582
    %v662 = vunpack.c.h.b16 %v582
    %v663 = vunpack.c.l.b16 %v583
    %v664 = vunpack.c.h.b16 %v583
    %v665 = vunpack.c.l.b16 %v584
    %v666 = vunpack.c.h.b16 %v584
    %v667 = vunpack.c.l.b16 %v585
    %v668 = vunpack.c.h.b16 %v585
    %v669 = vunpack.c.l.b16 %v586
    %v670 = vunpack.c.h.b16 %v586
    %v671 = vunpack.c.l.b16 %v587
    %v672 = vunpack.c.h.b16 %v587
    %v673 = vunpack.c.l.b16 %v588
    %v674 = vunpack.c.h.b16 %v588
    %v675 = vunpack.c.l.b16 %v589
    %v676 = vunpack.c.h.b16 %v589
    %v677 = vunpack.c.l.b16 %v590
    %v678 = vunpack.c.h.b16 %v590
    %v679 = vunpack.c.l.b16 %v591
    %v680 = vunpack.c.h.b16 %v591
    %v681 = vunpack.c.l.b16 %v592
    %v682 = vunpack.c.h.b16 %v592
    %v683 = vunpack.c.l.b16 %v593
    %v684 = vunpack.c.h.b16 %v593
    %v685 = vunpack.c.l.b16 %v594
    %v686 = vunpack.c.h.b16 %v594
    %v687 = vunpack.c.l.b16 %v595
    %v688 = vunpack.c.h.b16 %v595
    %v689 = vunpack.c.l.b16 %v596
    %v690 = vunpack.c.h.b16 %v596
    %v691 = vunpack.c.l.b16 %v597
    %v692 = vunpack.c.h.b16 %v597
    %v693 = vunpack.c.l.b16 %v598
    %v694 = vunpack.c.h.b16 %v598
    %v695 = vunpack.c.l.b16 %v599
    %v696 = vunpack.c.h.b16 %v599
    %v697 = vunpack.c.l.b16 %v600
    %v698 = vunpack.c.h.b16 %v600
    %v699 = vunpack.c.l.b16 %v601
    %v700 = vunpack.c.h.b16 %v601
    %v701 = vunpack.c.l.b16 %v602
    %v702 = vunpack.c.h.b16 %v602
    %v703 = vunpack.c.l.b16 %v603
    %v704 = vunpack.c.h.b16 %v603
    %v705 = vunpack.c.l.b16 %v604
    %v706 = vunpack.c.h.b16 %v604
    %v707 = vunpack.c.l.b16 %v605
    %v708 = vunpack.c.h.b16 %v605
    %v709 = vunpack.c.l.b16 %v606
    %v710 = vunpack.c.h.b16 %v606
    %v711 = vunpack.c.l.b16 %v607
    %v712 = vunpack.c.h.b16 %v607
    %v713 = vunpack.c.l.b16 %v608
    %v714 = vunpack.c.h.b16 %v608
    %v715 = vunpack.c.l.b16 %v609
    %v716 = vunpack.c.h.b16 %v609
    %v717 = vunpack.c.l.b16 %v610
    %v718 = vunpack.c.h.b16 %v610
    %v719 = vpack.c.b16 %v657, %v655
    %v720 = vpack.c.b16 %v658, %v656
    %v721 = vpack.c.b16 %v661, %v659
    %v722 = vpack.c.b16 %v662, %v660
    %v723 = vpack.c.b16 %v665, %v663
    %v724 = vpack.c.b16 %v666, %v664
    %v725 = vpack.c.b16 %v669, %v667
    %v726 = vpack.c.b16 %v670, %v668
    %v727 = vpack.c.b16 %v673, %v671
    %v728 = vpack.c.b16 %v674, %v672
    %v729 = vpack.c.b16 %v677, %v675
    %v730 = vpack.c.b16 %v678, %v676
    %v731 = vpack.c.b16 %v681, %v679
    %v732 = vpack.c.b16 %v682, %v680
    %v733 = vpack.c.b16 %v685, %v683
    %v734 = vpack.c.b16 %v686, %v684
    %v735 = vpack.c.b16 %v689, %v687
    %v736 = vpack.c.b16 %v690, %v688
    %v737 = vpack.c.b16 %v693, %v691
    %v738 = vpack.c.b16 %v694, %v692
    %v739 = vpack.c.b16 %v697, %v695
    %v740 = vpack.c.b16 %v698, %v696
    %v741 = vpack.c.b16 %v701, %v699
    %v742 = vpack.c.b16 %v702, %v700
    %v743 = vpack.c.b16 %v705, %v703
    %v744 = vpack.c.b16 %v706, %v704
    %v745 = vpack.c.b16 %v709, %v707
    %v746 = vpack.c.b16 %v710, %v708
    %v747 = vpack.c.b16 %v713, %v711
    %v748 = vpack.c.b16 %v714, %v712
    %v749 = vpack.c.b16 %v717, %v715
    %v750 = vpack.c.b16 %v718, %v716
    %783 = vmatprep.subr.bf16.mxu0 %v720
    %784 = vmatpush1.bf16.msra.mxu0 %v719
    %785 = vmatprep.subr.bf16.mxu0 %v722
    %786 = vmatpush1.bf16.msra.mxu0 %v721
    %787 = vmatprep.subr.bf16.mxu0 %v724
    %788 = vmatpush1.bf16.msra.mxu0 %v723
    %789 = vmatprep.subr.bf16.mxu0 %v726
    %790 = vmatpush1.bf16.msra.mxu0 %v725
    %791 = vmatprep.subr.bf16.mxu0 %v728
    %792 = vmatpush1.bf16.msra.mxu0 %v727
    %793 = vmatprep.subr.bf16.mxu0 %v730
    %794 = vmatpush1.bf16.msra.mxu0 %v729
    %795 = vmatprep.subr.bf16.mxu0 %v732
    %796 = vmatpush1.bf16.msra.mxu0 %v731
    %797 = vmatprep.subr.bf16.mxu0 %v734
    %798 = vmatpush1.bf16.msra.mxu0 %v733
    %799 = vmatprep.subr.bf16.mxu0 %v736
    %800 = vmatpush1.bf16.msra.mxu0 %v735
    %801 = vmatprep.subr.bf16.mxu0 %v738
    %802 = vmatpush1.bf16.msra.mxu0 %v737
    %803 = vmatprep.subr.bf16.mxu0 %v740
    %804 = vmatpush1.bf16.msra.mxu0 %v739
    %805 = vmatprep.subr.bf16.mxu0 %v742
    %806 = vmatpush1.bf16.msra.mxu0 %v741
    %807 = vmatprep.subr.bf16.mxu0 %v744
    %808 = vmatpush1.bf16.msra.mxu0 %v743
    %809 = vmatprep.subr.bf16.mxu0 %v746
    %810 = vmatpush1.bf16.msra.mxu0 %v745
    %811 = vmatprep.subr.bf16.mxu0 %v748
    %812 = vmatpush1.bf16.msra.mxu0 %v747
    %813 = vmatprep.subr.bf16.mxu0 %v750
    %814 = vmatpush1.bf16.msra.mxu0 %v749
    %815 = vmatprep.mubr.bf16.mxu0 %v572
    %816 = vmatmul.mubr.bf16.gmra.mrb[0].mxu0 %v571
    %v817 = vpop.f32.mrb[0].mxu0
    %v818 = vadd.f32 %v616, %v817
    %v819 = vpop.f32.mrb[0].mxu0
    %v820 = vadd.f32 %v620, %v819
    %v821 = vpop.f32.mrb[0].mxu0
    %v822 = vadd.f32 %v616, %v821
    %v823 = vpop.f32.mrb[0].mxu0
    %v824 = vadd.f32 %v620, %v823
    %825 = vmatprep.mubr.bf16.mxu0 %v574
    %826 = vmatmul.mubr.bf16.gmra.mrb[0].mxu0 %v573
    %v827 = vpop.f32.mrb[0].mxu0
    %v828 = vadd.f32 %v616, %v827
    %v829 = vpop.f32.mrb[0].mxu0
    %v830 = vadd.f32 %v620, %v829
    %v831 = vpop.f32.mrb[0].mxu0
    %v832 = vadd.f32 %v616, %v831
    %v833 = vpop.f32.mrb[0].mxu0
    %v834 = vadd.f32 %v620, %v833
    %835 = vmatprep.mubr.bf16.mxu0 %v576
    %836 = vmatmul.mubr.bf16.gmra.mrb[0].mxu0 %v575
    %v837 = vpop.f32.mrb[0].mxu0
    %v838 = vadd.f32 %v616, %v837
    %v839 = vpop.f32.mrb[0].mxu0
    %v840 = vadd.f32 %v620, %v839
    %v841 = vpop.f32.mrb[0].mxu0
    %v842 = vadd.f32 %v616, %v841
    %v843 = vpop.f32.mrb[0].mxu0
    %v844 = vadd.f32 %v620, %v843
    %845 = vmatprep.mubr.bf16.mxu0 %v578
    %846 = vmatmul.mubr.bf16.gmra.mrb[0].mxu0 %v577
    %v847 = vpop.f32.mrb[0].mxu0
    %v848 = vadd.f32 %v616, %v847
    %v849 = vpop.f32.mrb[0].mxu0
    %v850 = vadd.f32 %v620, %v849
    %v851 = vpop.f32.mrb[0].mxu0
    %v852 = vadd.f32 %v616, %v851
    %v853 = vpop.f32.mrb[0].mxu0
    %v854 = vadd.f32 %v620, %v853
    %855 = vdwg.mxu0
    %v856 = vld [vmem:[%s1] sm:$0xff]
    %vm857 = vcmp.ne.f32.partialorder %v856, 0.0
    %v858 = vsel %vm857, 1, 0
    %v859 = vcvt.s32.f32 %v858
    %v860 = vlaneseq
    %v861 = vshrl.u32 %v860, 7
    %v862 = vsub.s32 0, %v861
    %v863 = vrot.slane %v859, %v862
    %865 = vbcast.lane.b32.xlu0 %v863, 256
    %v866 = vpop.permute.xlu0 %865
    %v867 = vlaneseq
    %v868 = vshrl.u32 %v867, 7
    %v869 = vsub.s32 1, %v868
    %v870 = vrot.slane %v859, %v869
    %872 = vbcast.lane.b32.xlu0 %v870, 256
    %v873 = vpop.permute.xlu0 %872
    %v874 = vlaneseq
    %v875 = vshrl.u32 %v874, 7
    %v876 = vsub.s32 2, %v875
    %v877 = vrot.slane %v859, %v876
    %879 = vbcast.lane.b32.xlu0 %v877, 256
    %v880 = vpop.permute.xlu0 %879
    %v881 = vlaneseq
    %v882 = vshrl.u32 %v881, 7
    %v883 = vsub.s32 3, %v882
    %v884 = vrot.slane %v859, %v883
    %886 = vbcast.lane.b32.xlu0 %v884, 256
    %v887 = vpop.permute.xlu0 %886
    %v888 = vlaneseq
    %v889 = vshrl.u32 %v888, 7
    %v890 = vsub.s32 4, %v889
    %v891 = vrot.slane %v859, %v890
    %893 = vbcast.lane.b32.xlu0 %v891, 256
    %v894 = vpop.permute.xlu0 %893
    %v895 = vlaneseq
    %v896 = vshrl.u32 %v895, 7
    %v897 = vsub.s32 5, %v896
    %v898 = vrot.slane %v859, %v897
    %900 = vbcast.lane.b32.xlu0 %v898, 256
    %v901 = vpop.permute.xlu0 %900
    %v902 = vlaneseq
    %v903 = vshrl.u32 %v902, 7
    %v904 = vsub.s32 6, %v903
    %v905 = vrot.slane %v859, %v904
    %907 = vbcast.lane.b32.xlu0 %v905, 256
    %v908 = vpop.permute.xlu0 %907
    %v909 = vlaneseq
    %v910 = vshrl.u32 %v909, 7
    %v911 = vsub.s32 7, %v910
    %v912 = vrot.slane %v859, %v911
    %914 = vbcast.lane.b32.xlu0 %v912, 256
    %v915 = vpop.permute.xlu0 %914
    %v916 = vmul.f32 %v818, %v866
    %v917 = vmul.f32 %v820, %v866
    %v918 = vmul.f32 %v822, %v873
    %v919 = vmul.f32 %v824, %v873
    %v920 = vmul.f32 %v828, %v880
    %v921 = vmul.f32 %v830, %v880
    %v922 = vmul.f32 %v832, %v887
    %v923 = vmul.f32 %v834, %v887
    %v924 = vmul.f32 %v838, %v894
    %v925 = vmul.f32 %v840, %v894
    %v926 = vmul.f32 %v842, %v901
    %v927 = vmul.f32 %v844, %v901
    %v928 = vmul.f32 %v848, %v908
    %v929 = vmul.f32 %v850, %v908
    %v930 = vmul.f32 %v852, %v915
    %v931 = vmul.f32 %v854, %v915
    %v932 = vrot.slane %v916, 4
    %v933 = vadd.f32 %v916, %v932
    %v934 = vrot.slane %v933, 2
    %v935 = vadd.f32 %v933, %v934
    %v936 = vrot.slane %v935, 1
    %v937 = vadd.f32 %v935, %v936
    %v938 = vrot.slane %v917, 4
    %v939 = vadd.f32 %v917, %v938
    %v940 = vrot.slane %v939, 2
    %v941 = vadd.f32 %v939, %v940
    %v942 = vrot.slane %v941, 1
    %v943 = vadd.f32 %v941, %v942
    %v944 = vrot.slane %v918, 4
    %v945 = vadd.f32 %v918, %v944
    %v946 = vrot.slane %v945, 2
    %v947 = vadd.f32 %v945, %v946
    %v948 = vrot.slane %v947, 1
    %v949 = vadd.f32 %v947, %v948
    %v950 = vrot.slane %v919, 4
    %v951 = vadd.f32 %v919, %v950
    %v952 = vrot.slane %v951, 2
    %v953 = vadd.f32 %v951, %v952
    %v954 = vrot.slane %v953, 1
    %v955 = vadd.f32 %v953, %v954
    %v956 = vrot.slane %v920, 4
    %v957 = vadd.f32 %v920, %v956
    %v958 = vrot.slane %v957, 2
    %v959 = vadd.f32 %v957, %v958
    %v960 = vrot.slane %v959, 1
    %v961 = vadd.f32 %v959, %v960
    %v962 = vrot.slane %v921, 4
    %v963 = vadd.f32 %v921, %v962
    %v964 = vrot.slane %v963, 2
    %v965 = vadd.f32 %v963, %v964
    %v966 = vrot.slane %v965, 1
    %v967 = vadd.f32 %v965, %v966
    %v968 = vrot.slane %v922, 4
    %v969 = vadd.f32 %v922, %v968
    %v970 = vrot.slane %v969, 2
    %v971 = vadd.f32 %v969, %v970
    %v972 = vrot.slane %v971, 1
    %v973 = vadd.f32 %v971, %v972
    %v974 = vrot.slane %v923, 4
    %v975 = vadd.f32 %v923, %v974
    %v976 = vrot.slane %v975, 2
    %v977 = vadd.f32 %v975, %v976
    %v978 = vrot.slane %v977, 1
    %v979 = vadd.f32 %v977, %v978
    %v980 = vrot.slane %v924, 4
    %v981 = vadd.f32 %v924, %v980
    %v982 = vrot.slane %v981, 2
    %v983 = vadd.f32 %v981, %v982
    %v984 = vrot.slane %v983, 1
    %v985 = vadd.f32 %v983, %v984
    %v986 = vrot.slane %v925, 4
    %v987 = vadd.f32 %v925, %v986
    %v988 = vrot.slane %v987, 2
    %v989 = vadd.f32 %v987, %v988
    %v990 = vrot.slane %v989, 1
    %v991 = vadd.f32 %v989, %v990
    %v992 = vrot.slane %v926, 4
    %v993 = vadd.f32 %v926, %v992
    %v994 = vrot.slane %v993, 2
    %v995 = vadd.f32 %v993, %v994
    %v996 = vrot.slane %v995, 1
    %v997 = vadd.f32 %v995, %v996
    %v998 = vrot.slane %v927, 4
    %v999 = vadd.f32 %v927, %v998
    %v1000 = vrot.slane %v999, 2
    %v1001 = vadd.f32 %v999, %v1000
    %v1002 = vrot.slane %v1001, 1
    %v1003 = vadd.f32 %v1001, %v1002
    %v1004 = vrot.slane %v928, 4
    %v1005 = vadd.f32 %v928, %v1004
    %v1006 = vrot.slane %v1005, 2
    %v1007 = vadd.f32 %v1005, %v1006
    %v1008 = vrot.slane %v1007, 1
    %v1009 = vadd.f32 %v1007, %v1008
    %v1010 = vrot.slane %v929, 4
    %v1011 = vadd.f32 %v929, %v1010
    %v1012 = vrot.slane %v1011, 2
    %v1013 = vadd.f32 %v1011, %v1012
    %v1014 = vrot.slane %v1013, 1
    %v1015 = vadd.f32 %v1013, %v1014
    %v1016 = vrot.slane %v930, 4
    %v1017 = vadd.f32 %v930, %v1016
    %v1018 = vrot.slane %v1017, 2
    %v1019 = vadd.f32 %v1017, %v1018
    %v1020 = vrot.slane %v1019, 1
    %v1021 = vadd.f32 %v1019, %v1020
    %v1022 = vrot.slane %v931, 4
    %v1023 = vadd.f32 %v931, %v1022
    %v1024 = vrot.slane %v1023, 2
    %v1025 = vadd.f32 %v1023, %v1024
    %v1026 = vrot.slane %v1025, 1
    %v1027 = vadd.f32 %v1025, %v1026
    %v1028 = vpack.c.bf16 %v937, %v937
    %v1029 = vpack.c.bf16 %v943, %v943
    %v1030 = vpack.c.bf16 %v949, %v949
    %v1031 = vpack.c.bf16 %v955, %v955
    %v1032 = vpack.c.bf16 %v961, %v961
    %v1033 = vpack.c.bf16 %v967, %v967
    %v1034 = vpack.c.bf16 %v973, %v973
    %v1035 = vpack.c.bf16 %v979, %v979
    %v1036 = vpack.c.bf16 %v985, %v985
    %v1037 = vpack.c.bf16 %v991, %v991
    %v1038 = vpack.c.bf16 %v997, %v997
    %v1039 = vpack.c.bf16 %v1003, %v1003
    %v1040 = vpack.c.bf16 %v1009, %v1009
    %v1041 = vpack.c.bf16 %v1015, %v1015
    %v1042 = vpack.c.bf16 %v1021, %v1021
    %v1043 = vpack.c.bf16 %v1027, %v1027
    %v1044 = vld [vmem:[#allocation7] sm:$0xff]
    %v1045 = vld [vmem:[#allocation7 + $0x8] sm:$0xff]
    %v1046 = vld [vmem:[#allocation7 + $0x10] sm:$0xff]
    %v1047 = vld [vmem:[#allocation7 + $0x18] sm:$0xff]
    %v1048 = vld [vmem:[#allocation7 + $0x20] sm:$0xff]
    %v1049 = vld [vmem:[#allocation7 + $0x28] sm:$0xff]
    %v1050 = vld [vmem:[#allocation7 + $0x30] sm:$0xff]
    %v1051 = vld [vmem:[#allocation7 + $0x38] sm:$0xff]
    %v1052 = vld [vmem:[#allocation7 + $0x40] sm:$0xff]
    %v1053 = vld [vmem:[#allocation7 + $0x48] sm:$0xff]
    %v1054 = vld [vmem:[#allocation7 + $0x50] sm:$0xff]
    %v1055 = vld [vmem:[#allocation7 + $0x58] sm:$0xff]
    %v1056 = vld [vmem:[#allocation7 + $0x60] sm:$0xff]
    %v1057 = vld [vmem:[#allocation7 + $0x68] sm:$0xff]
    %v1058 = vld [vmem:[#allocation7 + $0x70] sm:$0xff]
    %v1059 = vld [vmem:[#allocation7 + $0x78] sm:$0xff]
    %v1060 = vld [vmem:[#allocation7 + $0x80] sm:$0xff]
    %v1061 = vld [vmem:[#allocation7 + $0x88] sm:$0xff]
    %v1062 = vld [vmem:[#allocation7 + $0x90] sm:$0xff]
    %v1063 = vld [vmem:[#allocation7 + $0x98] sm:$0xff]
    %v1064 = vld [vmem:[#allocation7 + $0xa0] sm:$0xff]
    %v1065 = vld [vmem:[#allocation7 + $0xa8] sm:$0xff]
    %v1066 = vld [vmem:[#allocation7 + $0xb0] sm:$0xff]
    %v1067 = vld [vmem:[#allocation7 + $0xb8] sm:$0xff]
    %v1068 = vld [vmem:[#allocation7 + $0xc0] sm:$0xff]
    %v1069 = vld [vmem:[#allocation7 + $0xc8] sm:$0xff]
    %v1070 = vld [vmem:[#allocation7 + $0xd0] sm:$0xff]
    %v1071 = vld [vmem:[#allocation7 + $0xd8] sm:$0xff]
    %v1072 = vld [vmem:[#allocation7 + $0xe0] sm:$0xff]
    %v1073 = vld [vmem:[#allocation7 + $0xe8] sm:$0xff]
    %v1074 = vld [vmem:[#allocation7 + $0xf0] sm:$0xff]
    %v1075 = vld [vmem:[#allocation7 + $0xf8] sm:$0xff]
    %v1076 = vld [vmem:[%s9] sm:$0x3]
    %v1078 = vlaneseq
    %v1079 = vshrl.u32 %v1078, 7
    %v1080 = vsub.s32 0, %v1079
    %v1081 = vrot.slane %v1076, %v1080
    %v1082 = vlaneseq
    %v1083 = vshrl.u32 %v1082, 7
    %v1084 = vsub.s32 1, %v1083
    %v1085 = vrot.slane %v1076, %v1084
    %v1104 = vunpack.c.l.b16 %v1028
    %v1105 = vunpack.c.l.b16 %v1029
    %v1106 = vunpack.c.l.b16 %v1030
    %v1107 = vunpack.c.l.b16 %v1031
    %v1108 = vunpack.c.l.b16 %v1032
    %v1109 = vunpack.c.l.b16 %v1033
    %v1110 = vunpack.c.l.b16 %v1034
    %v1111 = vunpack.c.l.b16 %v1035
    %v1112 = vunpack.c.l.b16 %v1036
    %v1113 = vunpack.c.l.b16 %v1037
    %v1114 = vunpack.c.l.b16 %v1038
    %v1115 = vunpack.c.l.b16 %v1039
    %v1116 = vunpack.c.l.b16 %v1040
    %v1117 = vunpack.c.l.b16 %v1041
    %v1118 = vunpack.c.l.b16 %v1042
    %v1119 = vunpack.c.l.b16 %v1043
    %vm1120 = vcmask 1041409
    %v1121 = vsel %vm1120, %v1106, %v1104
    %vm1122 = vcmask 1042434
    %v1123 = vsel %vm1122, %v1108, %v1121
    %vm1124 = vcmask 1043459
    %v1125 = vsel %vm1124, %v1110, %v1123
    %vm1126 = vcmask 1044484
    %v1127 = vsel %vm1126, %v1112, %v1125
    %vm1128 = vcmask 1045509
    %v1129 = vsel %vm1128, %v1114, %v1127
    %vm1130 = vcmask 1046534
    %v1131 = vsel %vm1130, %v1116, %v1129
    %vm1132 = vcmask 1047559
    %v1133 = vsel %vm1132, %v1118, %v1131
    %v1134 = vsel %vm1120, %v1107, %v1105
    %v1135 = vsel %vm1122, %v1109, %v1134
    %v1136 = vsel %vm1124, %v1111, %v1135
    %v1137 = vsel %vm1126, %v1113, %v1136
    %v1138 = vsel %vm1128, %v1115, %v1137
    %v1139 = vsel %vm1130, %v1117, %v1138
    %v1140 = vsel %vm1132, %v1119, %v1139
    %v1141 = vpack.c.b16 %v1133, %v1133
    %v1142 = vpack.c.b16 %v1140, %v1140
    %v1177 = vunpack.c.l.b16 %v1044
    %v1178 = vunpack.c.h.b16 %v1044
    %v1179 = vunpack.c.l.b16 %v1045
    %v1180 = vunpack.c.h.b16 %v1045
    %v1181 = vunpack.c.l.b16 %v1046
    %v1182 = vunpack.c.h.b16 %v1046
    %v1183 = vunpack.c.l.b16 %v1047
    %v1184 = vunpack.c.h.b16 %v1047
    %v1185 = vunpack.c.l.b16 %v1048
    %v1186 = vunpack.c.h.b16 %v1048
    %v1187 = vunpack.c.l.b16 %v1049
    %v1188 = vunpack.c.h.b16 %v1049
    %v1189 = vunpack.c.l.b16 %v1050
    %v1190 = vunpack.c.h.b16 %v1050
    %v1191 = vunpack.c.l.b16 %v1051
    %v1192 = vunpack.c.h.b16 %v1051
    %v1193 = vunpack.c.l.b16 %v1052
    %v1194 = vunpack.c.h.b16 %v1052
    %v1195 = vunpack.c.l.b16 %v1053
    %v1196 = vunpack.c.h.b16 %v1053
    %v1197 = vunpack.c.l.b16 %v1054
    %v1198 = vunpack.c.h.b16 %v1054
    %v1199 = vunpack.c.l.b16 %v1055
    %v1200 = vunpack.c.h.b16 %v1055
    %v1201 = vunpack.c.l.b16 %v1056
    %v1202 = vunpack.c.h.b16 %v1056
    %v1203 = vunpack.c.l.b16 %v1057
    %v1204 = vunpack.c.h.b16 %v1057
    %v1205 = vunpack.c.l.b16 %v1058
    %v1206 = vunpack.c.h.b16 %v1058
    %v1207 = vunpack.c.l.b16 %v1059
    %v1208 = vunpack.c.h.b16 %v1059
    %v1209 = vunpack.c.l.b16 %v1060
    %v1210 = vunpack.c.h.b16 %v1060
    %v1211 = vunpack.c.l.b16 %v1061
    %v1212 = vunpack.c.h.b16 %v1061
    %v1213 = vunpack.c.l.b16 %v1062
    %v1214 = vunpack.c.h.b16 %v1062
    %v1215 = vunpack.c.l.b16 %v1063
    %v1216 = vunpack.c.h.b16 %v1063
    %v1217 = vunpack.c.l.b16 %v1064
    %v1218 = vunpack.c.h.b16 %v1064
    %v1219 = vunpack.c.l.b16 %v1065
    %v1220 = vunpack.c.h.b16 %v1065
    %v1221 = vunpack.c.l.b16 %v1066
    %v1222 = vunpack.c.h.b16 %v1066
    %v1223 = vunpack.c.l.b16 %v1067
    %v1224 = vunpack.c.h.b16 %v1067
    %v1225 = vunpack.c.l.b16 %v1068
    %v1226 = vunpack.c.h.b16 %v1068
    %v1227 = vunpack.c.l.b16 %v1069
    %v1228 = vunpack.c.h.b16 %v1069
    %v1229 = vunpack.c.l.b16 %v1070
    %v1230 = vunpack.c.h.b16 %v1070
    %v1231 = vunpack.c.l.b16 %v1071
    %v1232 = vunpack.c.h.b16 %v1071
    %v1233 = vunpack.c.l.b16 %v1072
    %v1234 = vunpack.c.h.b16 %v1072
    %v1235 = vunpack.c.l.b16 %v1073
    %v1236 = vunpack.c.h.b16 %v1073
    %v1237 = vunpack.c.l.b16 %v1074
    %v1238 = vunpack.c.h.b16 %v1074
    %v1239 = vunpack.c.l.b16 %v1075
    %v1240 = vunpack.c.h.b16 %v1075
    %v1241 = vpack.c.b16 %v1179, %v1177
    %v1242 = vpack.c.b16 %v1180, %v1178
    %v1243 = vpack.c.b16 %v1183, %v1181
    %v1244 = vpack.c.b16 %v1184, %v1182
    %v1245 = vpack.c.b16 %v1187, %v1185
    %v1246 = vpack.c.b16 %v1188, %v1186
    %v1247 = vpack.c.b16 %v1191, %v1189
    %v1248 = vpack.c.b16 %v1192, %v1190
    %v1249 = vpack.c.b16 %v1195, %v1193
    %v1250 = vpack.c.b16 %v1196, %v1194
    %v1251 = vpack.c.b16 %v1199, %v1197
    %v1252 = vpack.c.b16 %v1200, %v1198
    %v1253 = vpack.c.b16 %v1203, %v1201
    %v1254 = vpack.c.b16 %v1204, %v1202
    %v1255 = vpack.c.b16 %v1207, %v1205
    %v1256 = vpack.c.b16 %v1208, %v1206
    %v1257 = vpack.c.b16 %v1211, %v1209
    %v1258 = vpack.c.b16 %v1212, %v1210
    %v1259 = vpack.c.b16 %v1215, %v1213
    %v1260 = vpack.c.b16 %v1216, %v1214
    %v1261 = vpack.c.b16 %v1219, %v1217
    %v1262 = vpack.c.b16 %v1220, %v1218
    %v1263 = vpack.c.b16 %v1223, %v1221
    %v1264 = vpack.c.b16 %v1224, %v1222
    %v1265 = vpack.c.b16 %v1227, %v1225
    %v1266 = vpack.c.b16 %v1228, %v1226
    %v1267 = vpack.c.b16 %v1231, %v1229
    %v1268 = vpack.c.b16 %v1232, %v1230
    %v1269 = vpack.c.b16 %v1235, %v1233
    %v1270 = vpack.c.b16 %v1236, %v1234
    %v1271 = vpack.c.b16 %v1239, %v1237
    %v1272 = vpack.c.b16 %v1240, %v1238
    %1305 = vmatprep.subr.bf16.mxu0 %v1242
    %1306 = vmatpush1.bf16.msra.mxu0 %v1241
    %1307 = vmatprep.subr.bf16.mxu0 %v1244
    %1308 = vmatpush1.bf16.msra.mxu0 %v1243
    %1309 = vmatprep.subr.bf16.mxu0 %v1246
    %1310 = vmatpush1.bf16.msra.mxu0 %v1245
    %1311 = vmatprep.subr.bf16.mxu0 %v1248
    %1312 = vmatpush1.bf16.msra.mxu0 %v1247
    %1313 = vmatprep.subr.bf16.mxu0 %v1250
    %1314 = vmatpush1.bf16.msra.mxu0 %v1249
    %1315 = vmatprep.subr.bf16.mxu0 %v1252
    %1316 = vmatpush1.bf16.msra.mxu0 %v1251
    %1317 = vmatprep.subr.bf16.mxu0 %v1254
    %1318 = vmatpush1.bf16.msra.mxu0 %v1253
    %1319 = vmatprep.subr.bf16.mxu0 %v1256
    %1320 = vmatpush1.bf16.msra.mxu0 %v1255
    %1321 = vmatprep.subr.bf16.mxu0 %v1258
    %1322 = vmatpush1.bf16.msra.mxu0 %v1257
    %1323 = vmatprep.subr.bf16.mxu0 %v1260
    %1324 = vmatpush1.bf16.msra.mxu0 %v1259
    %1325 = vmatprep.subr.bf16.mxu0 %v1262
    %1326 = vmatpush1.bf16.msra.mxu0 %v1261
    %1327 = vmatprep.subr.bf16.mxu0 %v1264
    %1328 = vmatpush1.bf16.msra.mxu0 %v1263
    %1329 = vmatprep.subr.bf16.mxu0 %v1266
    %1330 = vmatpush1.bf16.msra.mxu0 %v1265
    %1331 = vmatprep.subr.bf16.mxu0 %v1268
    %1332 = vmatpush1.bf16.msra.mxu0 %v1267
    %1333 = vmatprep.subr.bf16.mxu0 %v1270
    %1334 = vmatpush1.bf16.msra.mxu0 %v1269
    %1335 = vmatprep.subr.bf16.mxu0 %v1272
    %1336 = vmatpush1.bf16.msra.mxu0 %v1271
    %1337 = vmatprep.mubr.bf16.mxu0 %v1142
    %1338 = vmatmul.mubr.bf16.gmra.mrb[0].mxu0 %v1141
    %v1339 = vpop.f32.mrb[0].mxu0
    %v1340 = vadd.f32 %v1081, %v1339
    %v1341 = vpop.f32.mrb[0].mxu0
    %v1342 = vadd.f32 %v1085, %v1341
    %v1343 = vpop.f32.mrb[0].mxu0
    %v1344 = vpop.f32.mrb[0].mxu0
    %1345 = vdwg.mxu0
    %v1346 = vmax.f32 %v1340, 0.0
    %v1347 = vmax.f32 %v1342, 0.0
    %v1348 = vpack.c.bf16 %v1346, %v1346
    %v1349 = vpack.c.bf16 %v1347, %v1347
    %v1350 = vld [vmem:[#allocation8] sm:$0xff]
    %v1351 = vld [vmem:[#allocation8 + $0x8] sm:$0xff]
    %v1352 = vld [vmem:[#allocation8 + $0x10] sm:$0xff]
    %v1353 = vld [vmem:[#allocation8 + $0x18] sm:$0xff]
    %v1354 = vld [vmem:[#allocation8 + $0x20] sm:$0xff]
    %v1355 = vld [vmem:[#allocation8 + $0x28] sm:$0xff]
    %v1356 = vld [vmem:[#allocation8 + $0x30] sm:$0xff]
    %v1357 = vld [vmem:[#allocation8 + $0x38] sm:$0xff]
    %v1358 = vld [vmem:[#allocation8 + $0x40] sm:$0xff]
    %v1359 = vld [vmem:[#allocation8 + $0x48] sm:$0xff]
    %v1360 = vld [vmem:[#allocation8 + $0x50] sm:$0xff]
    %v1361 = vld [vmem:[#allocation8 + $0x58] sm:$0xff]
    %v1362 = vld [vmem:[#allocation8 + $0x60] sm:$0xff]
    %v1363 = vld [vmem:[#allocation8 + $0x68] sm:$0xff]
    %v1364 = vld [vmem:[#allocation8 + $0x70] sm:$0xff]
    %v1365 = vld [vmem:[#allocation8 + $0x78] sm:$0xff]
    %v1366 = vld [vmem:[#allocation8 + $0x80] sm:$0xff]
    %v1367 = vld [vmem:[#allocation8 + $0x88] sm:$0xff]
    %v1368 = vld [vmem:[#allocation8 + $0x90] sm:$0xff]
    %v1369 = vld [vmem:[#allocation8 + $0x98] sm:$0xff]
    %v1370 = vld [vmem:[#allocation8 + $0xa0] sm:$0xff]
    %v1371 = vld [vmem:[#allocation8 + $0xa8] sm:$0xff]
    %v1372 = vld [vmem:[#allocation8 + $0xb0] sm:$0xff]
    %v1373 = vld [vmem:[#allocation8 + $0xb8] sm:$0xff]
    %v1374 = vld [vmem:[#allocation8 + $0xc0] sm:$0xff]
    %v1375 = vld [vmem:[#allocation8 + $0xc8] sm:$0xff]
    %v1376 = vld [vmem:[#allocation8 + $0xd0] sm:$0xff]
    %v1377 = vld [vmem:[#allocation8 + $0xd8] sm:$0xff]
    %v1378 = vld [vmem:[#allocation8 + $0xe0] sm:$0xff]
    %v1379 = vld [vmem:[#allocation8 + $0xe8] sm:$0xff]
    %v1380 = vld [vmem:[#allocation8 + $0xf0] sm:$0xff]
    %v1381 = vld [vmem:[#allocation8 + $0xf8] sm:$0xff]
    %v1382 = vld [vmem:[%s11] sm:$0x3]
    %v1384 = vlaneseq
    %v1385 = vshrl.u32 %v1384, 7
    %v1386 = vsub.s32 0, %v1385
    %v1387 = vrot.slane %v1382, %v1386
    %v1388 = vlaneseq
    %v1389 = vshrl.u32 %v1388, 7
    %v1390 = vsub.s32 1, %v1389
    %v1391 = vrot.slane %v1382, %v1390
    %v1426 = vunpack.c.l.b16 %v1350
    %v1427 = vunpack.c.h.b16 %v1350
    %v1428 = vunpack.c.l.b16 %v1351
    %v1429 = vunpack.c.h.b16 %v1351
    %v1430 = vunpack.c.l.b16 %v1352
    %v1431 = vunpack.c.h.b16 %v1352
    %v1432 = vunpack.c.l.b16 %v1353
    %v1433 = vunpack.c.h.b16 %v1353
    %v1434 = vunpack.c.l.b16 %v1354
    %v1435 = vunpack.c.h.b16 %v1354
    %v1436 = vunpack.c.l.b16 %v1355
    %v1437 = vunpack.c.h.b16 %v1355
    %v1438 = vunpack.c.l.b16 %v1356
    %v1439 = vunpack.c.h.b16 %v1356
    %v1440 = vunpack.c.l.b16 %v1357
    %v1441 = vunpack.c.h.b16 %v1357
    %v1442 = vunpack.c.l.b16 %v1358
    %v1443 = vunpack.c.h.b16 %v1358
    %v1444 = vunpack.c.l.b16 %v1359
    %v1445 = vunpack.c.h.b16 %v1359
    %v1446 = vunpack.c.l.b16 %v1360
    %v1447 = vunpack.c.h.b16 %v1360
    %v1448 = vunpack.c.l.b16 %v1361
    %v1449 = vunpack.c.h.b16 %v1361
    %v1450 = vunpack.c.l.b16 %v1362
    %v1451 = vunpack.c.h.b16 %v1362
    %v1452 = vunpack.c.l.b16 %v1363
    %v1453 = vunpack.c.h.b16 %v1363
    %v1454 = vunpack.c.l.b16 %v1364
    %v1455 = vunpack.c.h.b16 %v1364
    %v1456 = vunpack.c.l.b16 %v1365
    %v1457 = vunpack.c.h.b16 %v1365
    %v1458 = vunpack.c.l.b16 %v1366
    %v1459 = vunpack.c.h.b16 %v1366
    %v1460 = vunpack.c.l.b16 %v1367
    %v1461 = vunpack.c.h.b16 %v1367
    %v1462 = vunpack.c.l.b16 %v1368
    %v1463 = vunpack.c.h.b16 %v1368
    %v1464 = vunpack.c.l.b16 %v1369
    %v1465 = vunpack.c.h.b16 %v1369
    %v1466 = vunpack.c.l.b16 %v1370
    %v1467 = vunpack.c.h.b16 %v1370
    %v1468 = vunpack.c.l.b16 %v1371
    %v1469 = vunpack.c.h.b16 %v1371
    %v1470 = vunpack.c.l.b16 %v1372
    %v1471 = vunpack.c.h.b16 %v1372
    %v1472 = vunpack.c.l.b16 %v1373
    %v1473 = vunpack.c.h.b16 %v1373
    %v1474 = vunpack.c.l.b16 %v1374
    %v1475 = vunpack.c.h.b16 %v1374
    %v1476 = vunpack.c.l.b16 %v1375
    %v1477 = vunpack.c.h.b16 %v1375
    %v1478 = vunpack.c.l.b16 %v1376
    %v1479 = vunpack.c.h.b16 %v1376
    %v1480 = vunpack.c.l.b16 %v1377
    %v1481 = vunpack.c.h.b16 %v1377
    %v1482 = vunpack.c.l.b16 %v1378
    %v1483 = vunpack.c.h.b16 %v1378
    %v1484 = vunpack.c.l.b16 %v1379
    %v1485 = vunpack.c.h.b16 %v1379
    %v1486 = vunpack.c.l.b16 %v1380
    %v1487 = vunpack.c.h.b16 %v1380
    %v1488 = vunpack.c.l.b16 %v1381
    %v1489 = vunpack.c.h.b16 %v1381
    %v1490 = vpack.c.b16 %v1428, %v1426
    %v1491 = vpack.c.b16 %v1429, %v1427
    %v1492 = vpack.c.b16 %v1432, %v1430
    %v1493 = vpack.c.b16 %v1433, %v1431
    %v1494 = vpack.c.b16 %v1436, %v1434
    %v1495 = vpack.c.b16 %v1437, %v1435
    %v1496 = vpack.c.b16 %v1440, %v1438
    %v1497 = vpack.c.b16 %v1441, %v1439
    %v1498 = vpack.c.b16 %v1444, %v1442
    %v1499 = vpack.c.b16 %v1445, %v1443
    %v1500 = vpack.c.b16 %v1448, %v1446
    %v1501 = vpack.c.b16 %v1449, %v1447
    %v1502 = vpack.c.b16 %v1452, %v1450
    %v1503 = vpack.c.b16 %v1453, %v1451
    %v1504 = vpack.c.b16 %v1456, %v1454
    %v1505 = vpack.c.b16 %v1457, %v1455
    %v1506 = vpack.c.b16 %v1460, %v1458
    %v1507 = vpack.c.b16 %v1461, %v1459
    %v1508 = vpack.c.b16 %v1464, %v1462
    %v1509 = vpack.c.b16 %v1465, %v1463
    %v1510 = vpack.c.b16 %v1468, %v1466
    %v1511 = vpack.c.b16 %v1469, %v1467
    %v1512 = vpack.c.b16 %v1472, %v1470
    %v1513 = vpack.c.b16 %v1473, %v1471
    %v1514 = vpack.c.b16 %v1476, %v1474
    %v1515 = vpack.c.b16 %v1477, %v1475
    %v1516 = vpack.c.b16 %v1480, %v1478
    %v1517 = vpack.c.b16 %v1481, %v1479
    %v1518 = vpack.c.b16 %v1484, %v1482
    %v1519 = vpack.c.b16 %v1485, %v1483
    %v1520 = vpack.c.b16 %v1488, %v1486
    %v1521 = vpack.c.b16 %v1489, %v1487
    %1554 = vmatprep.subr.bf16.mxu0 %v1491
    %1555 = vmatpush1.bf16.msra.mxu0 %v1490
    %1556 = vmatprep.subr.bf16.mxu0 %v1493
    %1557 = vmatpush1.bf16.msra.mxu0 %v1492
    %1558 = vmatprep.subr.bf16.mxu0 %v1495
    %1559 = vmatpush1.bf16.msra.mxu0 %v1494
    %1560 = vmatprep.subr.bf16.mxu0 %v1497
    %1561 = vmatpush1.bf16.msra.mxu0 %v1496
    %1562 = vmatprep.subr.bf16.mxu0 %v1499
    %1563 = vmatpush1.bf16.msra.mxu0 %v1498
    %1564 = vmatprep.subr.bf16.mxu0 %v1501
    %1565 = vmatpush1.bf16.msra.mxu0 %v1500
    %1566 = vmatprep.subr.bf16.mxu0 %v1503
    %1567 = vmatpush1.bf16.msra.mxu0 %v1502
    %1568 = vmatprep.subr.bf16.mxu0 %v1505
    %1569 = vmatpush1.bf16.msra.mxu0 %v1504
    %1570 = vmatprep.subr.bf16.mxu0 %v1507
    %1571 = vmatpush1.bf16.msra.mxu0 %v1506
    %1572 = vmatprep.subr.bf16.mxu0 %v1509
    %1573 = vmatpush1.bf16.msra.mxu0 %v1508
    %1574 = vmatprep.subr.bf16.mxu0 %v1511
    %1575 = vmatpush1.bf16.msra.mxu0 %v1510
    %1576 = vmatprep.subr.bf16.mxu0 %v1513
    %1577 = vmatpush1.bf16.msra.mxu0 %v1512
    %1578 = vmatprep.subr.bf16.mxu0 %v1515
    %1579 = vmatpush1.bf16.msra.mxu0 %v1514
    %1580 = vmatprep.subr.bf16.mxu0 %v1517
    %1581 = vmatpush1.bf16.msra.mxu0 %v1516
    %1582 = vmatprep.subr.bf16.mxu0 %v1519
    %1583 = vmatpush1.bf16.msra.mxu0 %v1518
    %1584 = vmatprep.subr.bf16.mxu0 %v1521
    %1585 = vmatpush1.bf16.msra.mxu0 %v1520
    %1586 = vmatprep.mubr.bf16.mxu0 %v1349
    %1587 = vmatmul.mubr.bf16.gmra.mrb[0].mxu0 %v1348
    %v1588 = vpop.f32.mrb[0].mxu0
    %v1589 = vadd.f32 %v1387, %v1588
    %v1590 = vpop.f32.mrb[0].mxu0
    %v1591 = vadd.f32 %v1391, %v1590
    %v1592 = vpop.f32.mrb[0].mxu0
    %v1593 = vpop.f32.mrb[0].mxu0
    %1594 = vdwg.mxu0
    %v1595 = vmax.f32 %v1589, 0.0
    %v1596 = vmax.f32 %v1591, 0.0
    %v1597 = vpack.c.bf16 %v1595, %v1595
    %v1598 = vpack.c.bf16 %v1596, %v1596
    %v1599 = vld [vmem:[%s12] sm:$0xf]
    %v1600 = vld [vmem:[%s12 + $0x4] sm:$0xf]
    %v1601 = vld [vmem:[%s12 + $0x8] sm:$0xf]
    %v1602 = vld [vmem:[%s12 + $0xc] sm:$0xf]
    %v1603 = vld [vmem:[%s12 + $0x10] sm:$0xf]
    %v1604 = vld [vmem:[%s12 + $0x14] sm:$0xf]
    %v1605 = vld [vmem:[%s12 + $0x18] sm:$0xf]
    %v1606 = vld [vmem:[%s12 + $0x1c] sm:$0xf]
    %v1607 = vld [vmem:[%s12 + $0x20] sm:$0xf]
    %v1608 = vld [vmem:[%s12 + $0x24] sm:$0xf]
    %v1609 = vld [vmem:[%s12 + $0x28] sm:$0xf]
    %v1610 = vld [vmem:[%s12 + $0x2c] sm:$0xf]
    %v1611 = vld [vmem:[%s12 + $0x30] sm:$0xf]
    %v1612 = vld [vmem:[%s12 + $0x34] sm:$0xf]
    %v1613 = vld [vmem:[%s12 + $0x38] sm:$0xf]
    %v1614 = vld [vmem:[%s12 + $0x3c] sm:$0xf]
    %v1615 = vld [vmem:[%s12 + $0x40] sm:$0xf]
    %v1616 = vld [vmem:[%s12 + $0x44] sm:$0xf]
    %v1617 = vld [vmem:[%s12 + $0x48] sm:$0xf]
    %v1618 = vld [vmem:[%s12 + $0x4c] sm:$0xf]
    %v1619 = vld [vmem:[%s12 + $0x50] sm:$0xf]
    %v1620 = vld [vmem:[%s12 + $0x54] sm:$0xf]
    %v1621 = vld [vmem:[%s12 + $0x58] sm:$0xf]
    %v1622 = vld [vmem:[%s12 + $0x5c] sm:$0xf]
    %v1623 = vld [vmem:[%s12 + $0x60] sm:$0xf]
    %v1624 = vld [vmem:[%s12 + $0x64] sm:$0xf]
    %v1625 = vld [vmem:[%s12 + $0x68] sm:$0xf]
    %v1626 = vld [vmem:[%s12 + $0x6c] sm:$0xf]
    %v1627 = vld [vmem:[%s12 + $0x70] sm:$0xf]
    %v1628 = vld [vmem:[%s12 + $0x74] sm:$0xf]
    %v1629 = vld [vmem:[%s12 + $0x78] sm:$0xf]
    %v1630 = vld [vmem:[%s12 + $0x7c] sm:$0xf]
    %v1631 = vld [vmem:[%s13] sm:$0x1]
    %v1633 = vlaneseq
    %v1634 = vshrl.u32 %v1633, 7
    %v1635 = vsub.s32 0, %v1634
    %v1636 = vrot.slane %v1631, %v1635
    %v1670 = vunpack.c.l.b16 %v1599
    %v1671 = vunpack.c.l.b16 %v1600
    %v1672 = vunpack.c.l.b16 %v1601
    %v1673 = vunpack.c.l.b16 %v1602
    %v1674 = vunpack.c.l.b16 %v1603
    %v1675 = vunpack.c.l.b16 %v1604
    %v1676 = vunpack.c.l.b16 %v1605
    %v1677 = vunpack.c.l.b16 %v1606
    %v1678 = vunpack.c.l.b16 %v1607
    %v1679 = vunpack.c.l.b16 %v1608
    %v1680 = vunpack.c.l.b16 %v1609
    %v1681 = vunpack.c.l.b16 %v1610
    %v1682 = vunpack.c.l.b16 %v1611
    %v1683 = vunpack.c.l.b16 %v1612
    %v1684 = vunpack.c.l.b16 %v1613
    %v1685 = vunpack.c.l.b16 %v1614
    %v1686 = vunpack.c.l.b16 %v1615
    %v1687 = vunpack.c.l.b16 %v1616
    %v1688 = vunpack.c.l.b16 %v1617
    %v1689 = vunpack.c.l.b16 %v1618
    %v1690 = vunpack.c.l.b16 %v1619
    %v1691 = vunpack.c.l.b16 %v1620
    %v1692 = vunpack.c.l.b16 %v1621
    %v1693 = vunpack.c.l.b16 %v1622
    %v1694 = vunpack.c.l.b16 %v1623
    %v1695 = vunpack.c.l.b16 %v1624
    %v1696 = vunpack.c.l.b16 %v1625
    %v1697 = vunpack.c.l.b16 %v1626
    %v1698 = vunpack.c.l.b16 %v1627
    %v1699 = vunpack.c.l.b16 %v1628
    %v1700 = vunpack.c.l.b16 %v1629
    %v1701 = vunpack.c.l.b16 %v1630
    %v1702 = vpack.c.b16 %v1671, %v1670
    %v1703 = vpack.c.b16 %v1673, %v1672
    %v1704 = vpack.c.b16 %v1675, %v1674
    %v1705 = vpack.c.b16 %v1677, %v1676
    %v1706 = vpack.c.b16 %v1679, %v1678
    %v1707 = vpack.c.b16 %v1681, %v1680
    %v1708 = vpack.c.b16 %v1683, %v1682
    %v1709 = vpack.c.b16 %v1685, %v1684
    %v1710 = vpack.c.b16 %v1687, %v1686
    %v1711 = vpack.c.b16 %v1689, %v1688
    %v1712 = vpack.c.b16 %v1691, %v1690
    %v1713 = vpack.c.b16 %v1693, %v1692
    %v1714 = vpack.c.b16 %v1695, %v1694
    %v1715 = vpack.c.b16 %v1697, %v1696
    %v1716 = vpack.c.b16 %v1699, %v1698
    %v1717 = vpack.c.b16 %v1701, %v1700
    %1734 = vmatprep.subr.bf16.mxu0 0
    %1735 = vmatpush1.bf16.msra.mxu0 %v1702
    %1736 = vmatprep.subr.bf16.mxu0 0
    %1737 = vmatpush1.bf16.msra.mxu0 %v1703
    %1738 = vmatprep.subr.bf16.mxu0 0
    %1739 = vmatpush1.bf16.msra.mxu0 %v1704
    %1740 = vmatprep.subr.bf16.mxu0 0
    %1741 = vmatpush1.bf16.msra.mxu0 %v1705
    %1742 = vmatprep.subr.bf16.mxu0 0
    %1743 = vmatpush1.bf16.msra.mxu0 %v1706
    %1744 = vmatprep.subr.bf16.mxu0 0
    %1745 = vmatpush1.bf16.msra.mxu0 %v1707
    %1746 = vmatprep.subr.bf16.mxu0 0
    %1747 = vmatpush1.bf16.msra.mxu0 %v1708
    %1748 = vmatprep.subr.bf16.mxu0 0
    %1749 = vmatpush1.bf16.msra.mxu0 %v1709
    %1750 = vmatprep.subr.bf16.mxu0 0
    %1751 = vmatpush1.bf16.msra.mxu0 %v1710
    %1752 = vmatprep.subr.bf16.mxu0 0
    %1753 = vmatpush1.bf16.msra.mxu0 %v1711
    %1754 = vmatprep.subr.bf16.mxu0 0
    %1755 = vmatpush1.bf16.msra.mxu0 %v1712
    %1756 = vmatprep.subr.bf16.mxu0 0
    %1757 = vmatpush1.bf16.msra.mxu0 %v1713
    %1758 = vmatprep.subr.bf16.mxu0 0
    %1759 = vmatpush1.bf16.msra.mxu0 %v1714
    %1760 = vmatprep.subr.bf16.mxu0 0
    %1761 = vmatpush1.bf16.msra.mxu0 %v1715
    %1762 = vmatprep.subr.bf16.mxu0 0
    %1763 = vmatpush1.bf16.msra.mxu0 %v1716
    %1764 = vmatprep.subr.bf16.mxu0 0
    %1765 = vmatpush1.bf16.msra.mxu0 %v1717
    %1766 = vmatprep.mubr.bf16.mxu0 %v1598
    %1767 = vmatmul.mubr.bf16.gmra.mrb[0].mxu0 %v1597
    %v1768 = vpop.f32.mrb[0].mxu0
    %v1769 = vadd.f32 %v1636, %v1768
    %v1770 = vpop.f32.mrb[0].mxu0
    %v1771 = vpop.f32.mrb[0].mxu0
    %v1772 = vpop.f32.mrb[0].mxu0
    %1773 = vdwg.mxu0
    %vm1774 = vcmask 64512
    %v1775 = vsel %vm1774, %v859, 0.0
    %1776 = vadd.xlane.f32.xlu0 %v1775
    %v1777 = vpop.xlane.xlu0 %1776
    %vm1778 = vcmp.gt.f32.partialorder %v1777, 0.0
    %v1779 = vsel %vm1778, 1, 0
    %vm1780 = vcmp.eq.s32.totalorder %v1779, 1
    %v1781 = vsel %vm1780, %v1769, 0.0
    %1782 = vst.msk [vmem:[#allocation10] sm:$0xff] %vm168, %v1781
    // Predicated region
    $region74: #{tpu_custom_call.1} parent=1 // pred_check
      _
    $region75: #{tpu_custom_call.1} parent=1 // pred_check_branch
      %1784 = sbr.rel (0) target = $region77
    $region76: #{tpu_custom_call.1} parent=1 // pred_region
      %s1786 = ssub.s32 128, 128
      %1787 = vsyncadd [#allocation4], %s1786
      %s1789 = sshll.u32 [#allocation10], 4
      %s1790 = int_to_ptr.vmem [resolvable:$true] %s1789
      %1792 = dma.vmem_to_hbm [thread:$0]  %s1790, 128, %s14, [#allocation4]
    $region77: #{tpu_custom_call.1} parent=1 // pred_fallthru
      _
    // Predicated region
    $region78: #{tpu_custom_call.1} parent=1 // pred_check
      _
    $region79: #{tpu_custom_call.1} parent=1 // pred_check_branch
      %1794 = sbr.rel (0) target = $region81
    $region80: #{tpu_custom_call.1} parent=1 // pred_region
      %1795 = dma.done [#allocation4], 128
    $region81: #{tpu_custom_call.1} parent=1 // pred_fallthru
      _
    %1796 = vsyncpa [#allocation3], 1
    %1797 = vsyncpa [#allocation6], 1
    %1798 = vsyncpa [#allocation9], 1
    %1799 = vsyncpa [#allocation4], 1

</llo_original>
